<compile_context>
chip_gen: v5e
topology: v5e:2x2
jax: 0.10.0
libtpu: 0.0.40
codegen_flags: <defaults>
</compile_context>

<pallas_src>
import jax
import jax.numpy as jnp
from jax import lax
from jax.experimental import pallas as pl
from jax.experimental.pallas import tpu as pltpu


# ----------------------------------------------------------------------------
# Fused kernel: image_fc + embedding + LSTM + (fc_add∘fc1) + relu + fc2
# ----------------------------------------------------------------------------
def _fused_forward_kernel(
    img_ref,     # (B, 1920)   image features                           VMEM
    cap_ref,     # (1, T*B)    caption token ids, time-major, int32     VMEM
    wimg_hbm,    # (E, 1920)   image_fc weight, lane-dense              HBM (manual DMA)
    bimg_ref,    # (1, E)      image_fc bias                            VMEM
    emb_ref,     # (V, E)      embedding table                          VMEM
    wih_ref,     # (E, 4H)     LSTM input->gates, gate order (i,f,o,g)  VMEM
    whh_ref,     # (H, 4H)     LSTM hidden->gates, gate order (i,f,o,g) VMEM
    bl_ref,      # (1, 4H)     combined LSTM bias (b_ih+b_hh), (i,f,o,g)
    w1_ref,      # (H, 128)    folded (Wa @ W1)
    b1_ref,      # (1, 128)    folded (ba @ W1 + b1)
    w2_ref,      # (128, Vp)   fc2 weight, vocab padded to multiple of 128
    b2_ref,      # (1, Vp)     fc2 bias, padded
    out_ref,     # (T*B, Vp)   logits for positions 1..S-1, time-major rows
    wimg_vmem,   # (E, 1920)   scratch: VMEM landing buffer for W_img
    dma_sem,     # ()          DMA completion semaphore
):
    B = img_ref.shape[0]
    TB = cap_ref.shape[1]
    T = TB // B
    S = T + 1
    H = whh_ref.shape[0]
    V = emb_ref.shape[0]
    f32 = jnp.float32

    # ---- overlap the only non-trivial weight transfer with the embedding phase ----
    wimg_cp = pltpu.make_async_copy(wimg_hbm, wimg_vmem, dma_sem)
    wimg_cp.start()

    # ---- embedding lookup as one-hot matmul (MXU; V is small) ---------------------
    # NOTE: out-of-range token ids (<0 or >=V) silently map to a zero embedding
    # instead of erroring like a gather.
    cap_row = cap_ref[...]                                        # (1, TB) int32
    iota_v = lax.broadcasted_iota(jnp.int32, (V, TB), 0)          # (V, TB)
    onehot = jnp.transpose((cap_row == iota_v).astype(f32))       # (TB, V)
    cap_emb = jnp.dot(onehot, emb_ref[...], preferred_element_type=f32)   # (TB, E)

    wimg_cp.wait()

    # ---- image_fc + ReLU: contract both operands on their minor (1920) axis -------
    img_emb = jnp.maximum(
        lax.dot_general(img_ref[...], wimg_vmem[...],
                        (((1,), (1,)), ((), ())),
                        preferred_element_type=f32) + bimg_ref[...],
        0.0,
    )  # (B, E)

    # ---- hoisted input projection for ALL positions: a single MXU launch ----------
    x_all = jnp.concatenate([img_emb, cap_emb], axis=0)           # (S*B, E)
    gx_all = (jnp.dot(x_all, wih_ref[...], preferred_element_type=f32)
              + bl_ref[...])                                      # (S*B, 4H)

    # ---- serial recurrence: only h @ Whh + 2 activation passes on the crit path ---
    # TODO(synk): keep Whh resident in the MXU across the 8 steps with
    # pltpu.matmul_push_rhs / matmul_acc_lhs / matmul_pop (or verify from the bundle
    # dump that Mosaic does not re-push the (32,128) weights every iteration).
    whh = whh_ref[...]
    h = jnp.zeros((B, H), f32)
    c = jnp.zeros((B, H), f32)
    hs = []
    for t in range(S):  # S is static -> fully unrolled, LLO-visible
        gates = gx_all[t * B:(t + 1) * B, :] + jnp.dot(
            h, whh, preferred_element_type=f32)                   # (B, 4H)
        sig = jax.nn.sigmoid(gates[:, : 3 * H])   # i, f, o in one EUP pass
        g = jnp.tanh(gates[:, 3 * H:])            # g in one EUP pass
        c = sig[:, H:2 * H] * c + sig[:, :H] * g
        h = sig[:, 2 * H:3 * H] * jnp.tanh(c)
        if t >= 1:  # position 0 is discarded by the model
            hs.append(h)
    h_all = jnp.concatenate(hs, axis=0)           # (T*B, H), lives in vregs

    # ---- fused head: (fc_add∘fc1) folded -> relu -> fc2 ---------------------------
    x = jnp.maximum(
        jnp.dot(h_all, w1_ref[...], preferred_element_type=f32) + b1_ref[...], 0.0
    )  # (T*B, 128)
    logits = jnp.dot(x, w2_ref[...], preferred_element_type=f32) + b2_ref[...]
    out_ref[...] = logits.astype(out_ref.dtype)


def _vmem():
    return pl.BlockSpec(memory_space=pltpu.MemorySpace.VMEM)


# ----------------------------------------------------------------------------
# Model: parameter init + one-time kernel-layout prep + forward
# ----------------------------------------------------------------------------
def init_params(key, embed_size, hidden_size, vocab_size):
    ks = jax.random.split(key, 12)

    def uni(k, shape, fan_in):
        bound = 1.0 / jnp.sqrt(fan_in)
        return jax.random.uniform(k, shape, jnp.float32, -bound, bound)

    E, H, V = embed_size, hidden_size, vocab_size
    return {
        # image_fc: Linear(1920, E) — stored transposed (in, out)
        "W_img": uni(ks[0], (1920, E), 1920),
        "b_img": uni(ks[1], (1, E), 1920),
        # embedding table (V, E)
        "embed": jax.random.normal(ks[2], (V, E), jnp.float32),
        # LSTM weights (PyTorch gate order i, f, g, o), stored transposed
        "Wih": uni(ks[3], (E, 4 * H), H),
        "Whh": uni(ks[4], (H, 4 * H), H),
        "b_lstm": uni(ks[5], (1, 4 * H), H) + uni(ks[6], (1, 4 * H), H),
        # fc_add: Linear(H, E)
        "Wa": uni(ks[7], (H, E), H),
        "ba": uni(ks[8], (1, E), H),
        # fc1: Linear(E, 128)
        "W1": uni(ks[9], (E, 128), E),
        "b1": uni(ks[10], (1, 128), E),
        # fc2: Linear(128, V)
        "W2": uni(ks[11], (128, V), 128),
        "b2": jnp.zeros((1, V), jnp.float32),
    }


def prepare_kernel_params(params):
    """One-time (outside jit) layout prep + parameter-level folds.

    Done once so the per-call wrapper does no weight materialization to HBM.
    """
    H = params["Whh"].shape[0]
    V = params["W2"].shape[1]
    Vp = ((V + 127) // 128) * 128  # lane-dense output width

    def perm_gates(w):
        # PyTorch gate order (i, f, g, o) -> (i, f, o, g) column blocks, so the
        # kernel can apply one sigmoid over [:, :3H] and one tanh over [:, 3H:].
        return jnp.concatenate(
            [w[..., 0:H], w[..., H:2 * H], w[..., 3 * H:4 * H], w[..., 2 * H:3 * H]],
            axis=-1)

    # TODO(synk): on v6e/v7x cast the weight operands below to bfloat16 (keep
    # preferred_element_type=f32 accumulation); kept f32 here to preserve the
    # 1e-3 check against the f32 reference.
    return {
        "W_imgT": jnp.asarray(params["W_img"].T),                # (E, 1920) lane-dense
        "b_img": params["b_img"],
        "embed": params["embed"],
        "Wih": perm_gates(params["Wih"]),
        "Whh": perm_gates(params["Whh"]),
        "b_lstm": perm_gates(params["b_lstm"]),
        "W1f": params["Wa"] @ params["W1"],                      # fc_add folded into fc1
        "b1f": params["ba"] @ params["W1"] + params["b1"],       # (dropout=identity, eval)
        "W2p": jnp.pad(params["W2"], ((0, 0), (0, Vp - V))),     # lane-dense vocab
        "b2p": jnp.pad(params["b2"], ((0, 0), (0, Vp - V))),
    }


@jax.jit
def lstm_model_forward(kparams, image_features, captions):
    B = image_features.shape[0]
    T = captions.shape[1]
    E = kparams["embed"].shape[1]
    V = kparams["embed"].shape[0]
    Vp = kparams["W2p"].shape[1]

    img_flat = image_features.reshape(B, 1920)
    # Time-major flat caption ids (row = t*B + b), lane-major (1, T*B).
    cap_row = jnp.transpose(captions).reshape(1, T * B).astype(jnp.int32)

    out_tm = pl.pallas_call(
        _fused_forward_kernel,
        out_shape=jax.ShapeDtypeStruct((T * B, Vp), jnp.float32),
        in_specs=[
            _vmem(),                              # img
            _vmem(),                              # cap (lane-major row)
            pl.BlockSpec(memory_space=pl.ANY),    # W_imgT: manual DMA, overlapped
            _vmem(), _vmem(), _vmem(), _vmem(), _vmem(),   # b_img, embed, Wih, Whh, b_lstm
            _vmem(), _vmem(), _vmem(), _vmem(),            # W1f, b1f, W2p, b2p
        ],
        out_specs=_vmem(),
        scratch_shapes=[
            pltpu.VMEM(kparams["W_imgT"].shape, jnp.float32),  # W_img landing buffer
            pltpu.SemaphoreType.DMA(()),
        ],
        # Single invocation, no grid: total VMEM footprint < 1 MiB, well under every
        # generation's scoped limit.
        # TODO(synk): for realistic vocab sizes, tile the vocab axis with a "parallel"
        # grid dimension sized against VMEM (mandatory on v7x: 64 MiB VMEM, 2 TCs).
    )(
        img_flat, cap_row,
        kparams["W_imgT"], kparams["b_img"], kparams["embed"],
        kparams["Wih"], kparams["Whh"], kparams["b_lstm"],
        kparams["W1f"], kparams["b1f"], kparams["W2p"], kparams["b2p"],
    )

    # (T*B, Vp) time-major -> (B, T, V); trivial reshuffle + padding slice.
    logits = jnp.transpose(out_tm.reshape(T, B, Vp), (1, 0, 2))[:, :, :V]
    return logits


# ----------------------------------------------------------------------------
# Pure-JAX reference (unfused, mirrors the PyTorch module) for verification
# ----------------------------------------------------------------------------
def reference_forward(params, image_features, captions):
    B = image_features.shape[0]
    E = params["W_img"].shape[1]
    H = params["Whh"].shape[0]

    img = jnp.maximum(image_features.reshape(B, 1920) @ params["W_img"]
                      + params["b_img"], 0.0).reshape(B, 1, E)
    cap = jnp.take(params["embed"], captions, axis=0)
    seq = jnp.concatenate([img, cap], axis=1)  # (B, S, E)

    def step(carry, x_t):
        h, c = carry
        gates = x_t @ params["Wih"] + h @ params["Whh"] + params["b_lstm"]
        i = jax.nn.sigmoid(gates[:, :H])
        f = jax.nn.sigmoid(gates[:, H:2 * H])
        g = jnp.tanh(gates[:, 2 * H:3 * H])
        o = jax.nn.sigmoid(gates[:, 3 * H:])
        c = f * c + i * g
        h = o * jnp.tanh(c)
        return (h, c), h

    init = (jnp.zeros((B, H), jnp.float32), jnp.zeros((B, H), jnp.float32))
    _, hs = jax.lax.scan(step, init, jnp.transpose(seq, (1, 0, 2)))
    lstm_out = jnp.transpose(hs, (1, 0, 2))

    comb = lstm_out @ params["Wa"] + params["ba"]
    x = jnp.maximum(comb @ params["W1"] + params["b1"], 0.0)
    out = x @ params["W2"] + params["b2"]
    return out[:, 1:, :]


# ----------------------------------------------------------------------------
if __name__ == "__main__":
    EMBED_SIZE = 32
    HIDDEN_SIZE = 32
    VOCAB_SIZE = 64
    BATCH = 2       # NOTE: MXU M-dim utilization is fundamentally limited by batch;
    CAP_LEN = 7     #       request-level batching is the only fix at these layer sizes.

    key = jax.random.PRNGKey(0)
    pkey, ikey, ckey = jax.random.split(key, 3)

    params = init_params(pkey, EMBED_SIZE, HIDDEN_SIZE, VOCAB_SIZE)
    kparams = prepare_kernel_params(params)   # one-time layout prep, outside the jit
    image_features = jax.random.normal(ikey, (BATCH, 1, 1920), jnp.float32)
    captions = jax.random.randint(ckey, (BATCH, CAP_LEN), 0, VOCAB_SIZE, jnp.int32)

    out = lstm_model_forward(kparams, image_features, captions)
    out = jax.block_until_ready(out)

    ref = reference_forward(params, image_features, captions)
    assert out.shape == (BATCH, CAP_LEN, VOCAB_SIZE), out.shape
    max_err = float(jnp.max(jnp.abs(out - ref)))
    assert jnp.allclose(out, ref, atol=1e-3, rtol=1e-3), max_err

    print("KERNEL_OK")
</pallas_src>

<mosaic_0001>
module attributes {stable_mosaic.version = 11 : i64} {
  func.func @_fused_forward_kernel(%arg0: memref<2x1920xf32, #tpu.memory_space<vmem>>, %arg1: memref<1x14xi32, #tpu.memory_space<vmem>>, %arg2: memref<32x1920xf32, #tpu.memory_space<any>>, %arg3: memref<1x32xf32, #tpu.memory_space<vmem>>, %arg4: memref<64x32xf32, #tpu.memory_space<vmem>>, %arg5: memref<32x128xf32, #tpu.memory_space<vmem>>, %arg6: memref<32x128xf32, #tpu.memory_space<vmem>>, %arg7: memref<1x128xf32, #tpu.memory_space<vmem>>, %arg8: memref<32x128xf32, #tpu.memory_space<vmem>>, %arg9: memref<1x128xf32, #tpu.memory_space<vmem>>, %arg10: memref<128x128xf32, #tpu.memory_space<vmem>>, %arg11: memref<1x128xf32, #tpu.memory_space<vmem>>, %arg12: memref<14x128xf32, #tpu.memory_space<vmem>>, %arg13: memref<32x1920xf32, #tpu.memory_space<vmem>>, %arg14: memref<!tpu.dma_semaphore, #tpu.memory_space<semaphore_mem>>) attributes {dimension_semantics = [], scalar_prefetch = 0 : i64, scratch_operands = 2 : i64, tpu.core_type = #tpu.core_type<tc>} {
    tpu.enqueue_dma source(%arg2 : memref<32x1920xf32, #tpu.memory_space<any>>) target(%arg13 : memref<32x1920xf32, #tpu.memory_space<vmem>>) target_semaphore(%arg14 : memref<!tpu.dma_semaphore, #tpu.memory_space<semaphore_mem>>)
    %c0 = arith.constant 0 : index
    %c0_0 = arith.constant 0 : index
    %0 = vector.load %arg1[%c0, %c0_0] : memref<1x14xi32, #tpu.memory_space<vmem>>, vector<1x14xi32>
    %1 = tpu.iota {dimensions = array<i32: 0>} : vector<64x14xi32>
    %2 = vector.broadcast %0 : vector<1x14xi32> to vector<64x14xi32>
    %3 = arith.cmpi eq, %2, %1 : vector<64x14xi32>
    %4 = arith.extui %3 : vector<64x14xi1> to vector<64x14xi32>
    %5 = arith.sitofp %4 : vector<64x14xi32> to vector<64x14xf32>
    %6 = tpu.transpose %5, [1, 0] : vector<64x14xf32> -> vector<14x64xf32>
    %c0_1 = arith.constant 0 : index
    %c0_2 = arith.constant 0 : index
    %7 = vector.load %arg4[%c0_1, %c0_2] : memref<64x32xf32, #tpu.memory_space<vmem>>, vector<64x32xf32>
    %cst = arith.constant dense<0.000000e+00> : vector<14x32xf32>
    %8 = tpu.matmul %6, %7, %cst {dimension_numbers = #tpu.dot_dimension_numbers<[1], [0], [0], [1], [0, 0, 1, 1], [], []>} : vector<14x64xf32>, vector<64x32xf32>, vector<14x32xf32> -> vector<14x32xf32>
    tpu.wait_dma2 semaphore(%arg14 : memref<!tpu.dma_semaphore, #tpu.memory_space<semaphore_mem>>) src(%arg2 : memref<32x1920xf32, #tpu.memory_space<any>>) dst(%arg13 : memref<32x1920xf32, #tpu.memory_space<vmem>>)
    %c0_3 = arith.constant 0 : index
    %c0_4 = arith.constant 0 : index
    %9 = vector.load %arg0[%c0_3, %c0_4] : memref<2x1920xf32, #tpu.memory_space<vmem>>, vector<2x1920xf32>
    %c0_5 = arith.constant 0 : index
    %c0_6 = arith.constant 0 : index
    %10 = vector.load %arg13[%c0_5, %c0_6] : memref<32x1920xf32, #tpu.memory_space<vmem>>, vector<32x1920xf32>
    %cst_7 = arith.constant dense<0.000000e+00> : vector<2x32xf32>
    %11 = tpu.matmul %9, %10, %cst_7 {dimension_numbers = #tpu.dot_dimension_numbers<[1], [1], [0], [0], [0, 0, 1, 0], [], []>} : vector<2x1920xf32>, vector<32x1920xf32>, vector<2x32xf32> -> vector<2x32xf32>
    %c0_8 = arith.constant 0 : index
    %c0_9 = arith.constant 0 : index
    %12 = vector.load %arg3[%c0_8, %c0_9] : memref<1x32xf32, #tpu.memory_space<vmem>>, vector<1x32xf32>
    %13 = vector.broadcast %12 : vector<1x32xf32> to vector<2x32xf32>
    %14 = arith.addf %11, %13 : vector<2x32xf32>
    %cst_10 = arith.constant 0.000000e+00 : f32
    %15 = vector.broadcast %cst_10 : f32 to vector<2x32xf32>
    %16 = arith.maximumf %14, %15 : vector<2x32xf32>
    %17 = tpu.concatenate %16, %8 in 0 : vector<2x32xf32>, vector<14x32xf32> -> vector<16x32xf32>
    %c0_11 = arith.constant 0 : index
    %c0_12 = arith.constant 0 : index
    %18 = vector.load %arg5[%c0_11, %c0_12] : memref<32x128xf32, #tpu.memory_space<vmem>>, vector<32x128xf32>
    %cst_13 = arith.constant dense<0.000000e+00> : vector<16x128xf32>
    %19 = tpu.matmul %17, %18, %cst_13 {dimension_numbers = #tpu.dot_dimension_numbers<[1], [0], [0], [1], [0, 0, 1, 1], [], []>} : vector<16x32xf32>, vector<32x128xf32>, vector<16x128xf32> -> vector<16x128xf32>
    %c0_14 = arith.constant 0 : index
    %c0_15 = arith.constant 0 : index
    %20 = vector.load %arg7[%c0_14, %c0_15] : memref<1x128xf32, #tpu.memory_space<vmem>>, vector<1x128xf32>
    %21 = vector.broadcast %20 : vector<1x128xf32> to vector<16x128xf32>
    %22 = arith.addf %19, %21 : vector<16x128xf32>
    %c0_16 = arith.constant 0 : index
    %c0_17 = arith.constant 0 : index
    %23 = vector.load %arg6[%c0_16, %c0_17] : memref<32x128xf32, #tpu.memory_space<vmem>>, vector<32x128xf32>
    %cst_18 = arith.constant 0.000000e+00 : f32
    %24 = vector.broadcast %cst_18 : f32 to vector<2x32xf32>
    %cst_19 = arith.constant 0.000000e+00 : f32
    %25 = vector.broadcast %cst_19 : f32 to vector<2x32xf32>
    %26 = vector.extract_strided_slice %22 {offsets = [0, 0], sizes = [2, 128], strides = [1, 1]} : vector<16x128xf32> to vector<2x128xf32>
    %cst_20 = arith.constant dense<0.000000e+00> : vector<2x128xf32>
    %27 = tpu.matmul %24, %23, %cst_20 {dimension_numbers = #tpu.dot_dimension_numbers<[1], [0], [0], [1], [0, 0, 1, 1], [], []>} : vector<2x32xf32>, vector<32x128xf32>, vector<2x128xf32> -> vector<2x128xf32>
    %28 = arith.addf %26, %27 : vector<2x128xf32>
    %29 = vector.extract_strided_slice %28 {offsets = [0, 0], sizes = [2, 96], strides = [1, 1]} : vector<2x128xf32> to vector<2x96xf32>
    %30 = arith.negf %29 : vector<2x96xf32>
    %31 = math.exp %30 : vector<2x96xf32>
    %cst_21 = arith.constant 1.000000e+00 : f32
    %32 = vector.broadcast %cst_21 : f32 to vector<2x96xf32>
    %33 = arith.addf %32, %31 : vector<2x96xf32>
    %34 = arith.divf %32, %33 : vector<2x96xf32>
    %35 = vector.extract_strided_slice %28 {offsets = [0, 96], sizes = [2, 32], strides = [1, 1]} : vector<2x128xf32> to vector<2x32xf32>
    %36 = math.tanh %35 : vector<2x32xf32>
    %37 = vector.extract_strided_slice %34 {offsets = [0, 32], sizes = [2, 32], strides = [1, 1]} : vector<2x96xf32> to vector<2x32xf32>
    %38 = arith.mulf %37, %25 : vector<2x32xf32>
    %39 = vector.extract_strided_slice %34 {offsets = [0, 0], sizes = [2, 32], strides = [1, 1]} : vector<2x96xf32> to vector<2x32xf32>
    %40 = arith.mulf %39, %36 : vector<2x32xf32>
    %41 = arith.addf %38, %40 : vector<2x32xf32>
    %42 = vector.extract_strided_slice %34 {offsets = [0, 64], sizes = [2, 32], strides = [1, 1]} : vector<2x96xf32> to vector<2x32xf32>
    %43 = math.tanh %41 : vector<2x32xf32>
    %44 = arith.mulf %42, %43 : vector<2x32xf32>
    %45 = vector.extract_strided_slice %22 {offsets = [2, 0], sizes = [2, 128], strides = [1, 1]} : vector<16x128xf32> to vector<2x128xf32>
    %cst_22 = arith.constant dense<0.000000e+00> : vector<2x128xf32>
    %46 = tpu.matmul %44, %23, %cst_22 {dimension_numbers = #tpu.dot_dimension_numbers<[1], [0], [0], [1], [0, 0, 1, 1], [], []>} : vector<2x32xf32>, vector<32x128xf32>, vector<2x128xf32> -> vector<2x128xf32>
    %47 = arith.addf %45, %46 : vector<2x128xf32>
    %48 = vector.extract_strided_slice %47 {offsets = [0, 0], sizes = [2, 96], strides = [1, 1]} : vector<2x128xf32> to vector<2x96xf32>
    %49 = arith.negf %48 : vector<2x96xf32>
    %50 = math.exp %49 : vector<2x96xf32>
    %cst_23 = arith.constant 1.000000e+00 : f32
    %51 = vector.broadcast %cst_23 : f32 to vector<2x96xf32>
    %52 = arith.addf %51, %50 : vector<2x96xf32>
    %53 = arith.divf %51, %52 : vector<2x96xf32>
    %54 = vector.extract_strided_slice %47 {offsets = [0, 96], sizes = [2, 32], strides = [1, 1]} : vector<2x128xf32> to vector<2x32xf32>
    %55 = math.tanh %54 : vector<2x32xf32>
    %56 = vector.extract_strided_slice %53 {offsets = [0, 32], sizes = [2, 32], strides = [1, 1]} : vector<2x96xf32> to vector<2x32xf32>
    %57 = arith.mulf %56, %41 : vector<2x32xf32>
    %58 = vector.extract_strided_slice %53 {offsets = [0, 0], sizes = [2, 32], strides = [1, 1]} : vector<2x96xf32> to vector<2x32xf32>
    %59 = arith.mulf %58, %55 : vector<2x32xf32>
    %60 = arith.addf %57, %59 : vector<2x32xf32>
    %61 = vector.extract_strided_slice %53 {offsets = [0, 64], sizes = [2, 32], strides = [1, 1]} : vector<2x96xf32> to vector<2x32xf32>
    %62 = math.tanh %60 : vector<2x32xf32>
    %63 = arith.mulf %61, %62 : vector<2x32xf32>
    %64 = vector.extract_strided_slice %22 {offsets = [4, 0], sizes = [2, 128], strides = [1, 1]} : vector<16x128xf32> to vector<2x128xf32>
    %cst_24 = arith.constant dense<0.000000e+00> : vector<2x128xf32>
    %65 = tpu.matmul %63, %23, %cst_24 {dimension_numbers = #tpu.dot_dimension_numbers<[1], [0], [0], [1], [0, 0, 1, 1], [], []>} : vector<2x32xf32>, vector<32x128xf32>, vector<2x128xf32> -> vector<2x128xf32>
    %66 = arith.addf %64, %65 : vector<2x128xf32>
    %67 = vector.extract_strided_slice %66 {offsets = [0, 0], sizes = [2, 96], strides = [1, 1]} : vector<2x128xf32> to vector<2x96xf32>
    %68 = arith.negf %67 : vector<2x96xf32>
    %69 = math.exp %68 : vector<2x96xf32>
    %cst_25 = arith.constant 1.000000e+00 : f32
    %70 = vector.broadcast %cst_25 : f32 to vector<2x96xf32>
    %71 = arith.addf %70, %69 : vector<2x96xf32>
    %72 = arith.divf %70, %71 : vector<2x96xf32>
    %73 = vector.extract_strided_slice %66 {offsets = [0, 96], sizes = [2, 32], strides = [1, 1]} : vector<2x128xf32> to vector<2x32xf32>
    %74 = math.tanh %73 : vector<2x32xf32>
    %75 = vector.extract_strided_slice %72 {offsets = [0, 32], sizes = [2, 32], strides = [1, 1]} : vector<2x96xf32> to vector<2x32xf32>
    %76 = arith.mulf %75, %60 : vector<2x32xf32>
    %77 = vector.extract_strided_slice %72 {offsets = [0, 0], sizes = [2, 32], strides = [1, 1]} : vector<2x96xf32> to vector<2x32xf32>
    %78 = arith.mulf %77, %74 : vector<2x32xf32>
    %79 = arith.addf %76, %78 : vector<2x32xf32>
    %80 = vector.extract_strided_slice %72 {offsets = [0, 64], sizes = [2, 32], strides = [1, 1]} : vector<2x96xf32> to vector<2x32xf32>
    %81 = math.tanh %79 : vector<2x32xf32>
    %82 = arith.mulf %80, %81 : vector<2x32xf32>
    %83 = vector.extract_strided_slice %22 {offsets = [6, 0], sizes = [2, 128], strides = [1, 1]} : vector<16x128xf32> to vector<2x128xf32>
    %cst_26 = arith.constant dense<0.000000e+00> : vector<2x128xf32>
    %84 = tpu.matmul %82, %23, %cst_26 {dimension_numbers = #tpu.dot_dimension_numbers<[1], [0], [0], [1], [0, 0, 1, 1], [], []>} : vector<2x32xf32>, vector<32x128xf32>, vector<2x128xf32> -> vector<2x128xf32>
    %85 = arith.addf %83, %84 : vector<2x128xf32>
    %86 = vector.extract_strided_slice %85 {offsets = [0, 0], sizes = [2, 96], strides = [1, 1]} : vector<2x128xf32> to vector<2x96xf32>
    %87 = arith.negf %86 : vector<2x96xf32>
    %88 = math.exp %87 : vector<2x96xf32>
    %cst_27 = arith.constant 1.000000e+00 : f32
    %89 = vector.broadcast %cst_27 : f32 to vector<2x96xf32>
    %90 = arith.addf %89, %88 : vector<2x96xf32>
    %91 = arith.divf %89, %90 : vector<2x96xf32>
    %92 = vector.extract_strided_slice %85 {offsets = [0, 96], sizes = [2, 32], strides = [1, 1]} : vector<2x128xf32> to vector<2x32xf32>
    %93 = math.tanh %92 : vector<2x32xf32>
    %94 = vector.extract_strided_slice %91 {offsets = [0, 32], sizes = [2, 32], strides = [1, 1]} : vector<2x96xf32> to vector<2x32xf32>
    %95 = arith.mulf %94, %79 : vector<2x32xf32>
    %96 = vector.extract_strided_slice %91 {offsets = [0, 0], sizes = [2, 32], strides = [1, 1]} : vector<2x96xf32> to vector<2x32xf32>
    %97 = arith.mulf %96, %93 : vector<2x32xf32>
    %98 = arith.addf %95, %97 : vector<2x32xf32>
    %99 = vector.extract_strided_slice %91 {offsets = [0, 64], sizes = [2, 32], strides = [1, 1]} : vector<2x96xf32> to vector<2x32xf32>
    %100 = math.tanh %98 : vector<2x32xf32>
    %101 = arith.mulf %99, %100 : vector<2x32xf32>
    %102 = vector.extract_strided_slice %22 {offsets = [8, 0], sizes = [2, 128], strides = [1, 1]} : vector<16x128xf32> to vector<2x128xf32>
    %cst_28 = arith.constant dense<0.000000e+00> : vector<2x128xf32>
    %103 = tpu.matmul %101, %23, %cst_28 {dimension_numbers = #tpu.dot_dimension_numbers<[1], [0], [0], [1], [0, 0, 1, 1], [], []>} : vector<2x32xf32>, vector<32x128xf32>, vector<2x128xf32> -> vector<2x128xf32>
    %104 = arith.addf %102, %103 : vector<2x128xf32>
    %105 = vector.extract_strided_slice %104 {offsets = [0, 0], sizes = [2, 96], strides = [1, 1]} : vector<2x128xf32> to vector<2x96xf32>
    %106 = arith.negf %105 : vector<2x96xf32>
    %107 = math.exp %106 : vector<2x96xf32>
    %cst_29 = arith.constant 1.000000e+00 : f32
    %108 = vector.broadcast %cst_29 : f32 to vector<2x96xf32>
    %109 = arith.addf %108, %107 : vector<2x96xf32>
    %110 = arith.divf %108, %109 : vector<2x96xf32>
    %111 = vector.extract_strided_slice %104 {offsets = [0, 96], sizes = [2, 32], strides = [1, 1]} : vector<2x128xf32> to vector<2x32xf32>
    %112 = math.tanh %111 : vector<2x32xf32>
    %113 = vector.extract_strided_slice %110 {offsets = [0, 32], sizes = [2, 32], strides = [1, 1]} : vector<2x96xf32> to vector<2x32xf32>
    %114 = arith.mulf %113, %98 : vector<2x32xf32>
    %115 = vector.extract_strided_slice %110 {offsets = [0, 0], sizes = [2, 32], strides = [1, 1]} : vector<2x96xf32> to vector<2x32xf32>
    %116 = arith.mulf %115, %112 : vector<2x32xf32>
    %117 = arith.addf %114, %116 : vector<2x32xf32>
    %118 = vector.extract_strided_slice %110 {offsets = [0, 64], sizes = [2, 32], strides = [1, 1]} : vector<2x96xf32> to vector<2x32xf32>
    %119 = math.tanh %117 : vector<2x32xf32>
    %120 = arith.mulf %118, %119 : vector<2x32xf32>
    %121 = vector.extract_strided_slice %22 {offsets = [10, 0], sizes = [2, 128], strides = [1, 1]} : vector<16x128xf32> to vector<2x128xf32>
    %cst_30 = arith.constant dense<0.000000e+00> : vector<2x128xf32>
    %122 = tpu.matmul %120, %23, %cst_30 {dimension_numbers = #tpu.dot_dimension_numbers<[1], [0], [0], [1], [0, 0, 1, 1], [], []>} : vector<2x32xf32>, vector<32x128xf32>, vector<2x128xf32> -> vector<2x128xf32>
    %123 = arith.addf %121, %122 : vector<2x128xf32>
    %124 = vector.extract_strided_slice %123 {offsets = [0, 0], sizes = [2, 96], strides = [1, 1]} : vector<2x128xf32> to vector<2x96xf32>
    %125 = arith.negf %124 : vector<2x96xf32>
    %126 = math.exp %125 : vector<2x96xf32>
    %cst_31 = arith.constant 1.000000e+00 : f32
    %127 = vector.broadcast %cst_31 : f32 to vector<2x96xf32>
    %128 = arith.addf %127, %126 : vector<2x96xf32>
    %129 = arith.divf %127, %128 : vector<2x96xf32>
    %130 = vector.extract_strided_slice %123 {offsets = [0, 96], sizes = [2, 32], strides = [1, 1]} : vector<2x128xf32> to vector<2x32xf32>
    %131 = math.tanh %130 : vector<2x32xf32>
    %132 = vector.extract_strided_slice %129 {offsets = [0, 32], sizes = [2, 32], strides = [1, 1]} : vector<2x96xf32> to vector<2x32xf32>
    %133 = arith.mulf %132, %117 : vector<2x32xf32>
    %134 = vector.extract_strided_slice %129 {offsets = [0, 0], sizes = [2, 32], strides = [1, 1]} : vector<2x96xf32> to vector<2x32xf32>
    %135 = arith.mulf %134, %131 : vector<2x32xf32>
    %136 = arith.addf %133, %135 : vector<2x32xf32>
    %137 = vector.extract_strided_slice %129 {offsets = [0, 64], sizes = [2, 32], strides = [1, 1]} : vector<2x96xf32> to vector<2x32xf32>
    %138 = math.tanh %136 : vector<2x32xf32>
    %139 = arith.mulf %137, %138 : vector<2x32xf32>
    %140 = vector.extract_strided_slice %22 {offsets = [12, 0], sizes = [2, 128], strides = [1, 1]} : vector<16x128xf32> to vector<2x128xf32>
    %cst_32 = arith.constant dense<0.000000e+00> : vector<2x128xf32>
    %141 = tpu.matmul %139, %23, %cst_32 {dimension_numbers = #tpu.dot_dimension_numbers<[1], [0], [0], [1], [0, 0, 1, 1], [], []>} : vector<2x32xf32>, vector<32x128xf32>, vector<2x128xf32> -> vector<2x128xf32>
    %142 = arith.addf %140, %141 : vector<2x128xf32>
    %143 = vector.extract_strided_slice %142 {offsets = [0, 0], sizes = [2, 96], strides = [1, 1]} : vector<2x128xf32> to vector<2x96xf32>
    %144 = arith.negf %143 : vector<2x96xf32>
    %145 = math.exp %144 : vector<2x96xf32>
    %cst_33 = arith.constant 1.000000e+00 : f32
    %146 = vector.broadcast %cst_33 : f32 to vector<2x96xf32>
    %147 = arith.addf %146, %145 : vector<2x96xf32>
    %148 = arith.divf %146, %147 : vector<2x96xf32>
    %149 = vector.extract_strided_slice %142 {offsets = [0, 96], sizes = [2, 32], strides = [1, 1]} : vector<2x128xf32> to vector<2x32xf32>
    %150 = math.tanh %149 : vector<2x32xf32>
    %151 = vector.extract_strided_slice %148 {offsets = [0, 32], sizes = [2, 32], strides = [1, 1]} : vector<2x96xf32> to vector<2x32xf32>
    %152 = arith.mulf %151, %136 : vector<2x32xf32>
    %153 = vector.extract_strided_slice %148 {offsets = [0, 0], sizes = [2, 32], strides = [1, 1]} : vector<2x96xf32> to vector<2x32xf32>
    %154 = arith.mulf %153, %150 : vector<2x32xf32>
    %155 = arith.addf %152, %154 : vector<2x32xf32>
    %156 = vector.extract_strided_slice %148 {offsets = [0, 64], sizes = [2, 32], strides = [1, 1]} : vector<2x96xf32> to vector<2x32xf32>
    %157 = math.tanh %155 : vector<2x32xf32>
    %158 = arith.mulf %156, %157 : vector<2x32xf32>
    %159 = vector.extract_strided_slice %22 {offsets = [14, 0], sizes = [2, 128], strides = [1, 1]} : vector<16x128xf32> to vector<2x128xf32>
    %cst_34 = arith.constant dense<0.000000e+00> : vector<2x128xf32>
    %160 = tpu.matmul %158, %23, %cst_34 {dimension_numbers = #tpu.dot_dimension_numbers<[1], [0], [0], [1], [0, 0, 1, 1], [], []>} : vector<2x32xf32>, vector<32x128xf32>, vector<2x128xf32> -> vector<2x128xf32>
    %161 = arith.addf %159, %160 : vector<2x128xf32>
    %162 = vector.extract_strided_slice %161 {offsets = [0, 0], sizes = [2, 96], strides = [1, 1]} : vector<2x128xf32> to vector<2x96xf32>
    %163 = arith.negf %162 : vector<2x96xf32>
    %164 = math.exp %163 : vector<2x96xf32>
    %cst_35 = arith.constant 1.000000e+00 : f32
    %165 = vector.broadcast %cst_35 : f32 to vector<2x96xf32>
    %166 = arith.addf %165, %164 : vector<2x96xf32>
    %167 = arith.divf %165, %166 : vector<2x96xf32>
    %168 = vector.extract_strided_slice %161 {offsets = [0, 96], sizes = [2, 32], strides = [1, 1]} : vector<2x128xf32> to vector<2x32xf32>
    %169 = math.tanh %168 : vector<2x32xf32>
    %170 = vector.extract_strided_slice %167 {offsets = [0, 32], sizes = [2, 32], strides = [1, 1]} : vector<2x96xf32> to vector<2x32xf32>
    %171 = arith.mulf %170, %155 : vector<2x32xf32>
    %172 = vector.extract_strided_slice %167 {offsets = [0, 0], sizes = [2, 32], strides = [1, 1]} : vector<2x96xf32> to vector<2x32xf32>
    %173 = arith.mulf %172, %169 : vector<2x32xf32>
    %174 = arith.addf %171, %173 : vector<2x32xf32>
    %175 = vector.extract_strided_slice %167 {offsets = [0, 64], sizes = [2, 32], strides = [1, 1]} : vector<2x96xf32> to vector<2x32xf32>
    %176 = math.tanh %174 : vector<2x32xf32>
    %177 = arith.mulf %175, %176 : vector<2x32xf32>
    %178 = tpu.concatenate %63, %82, %101, %120, %139, %158, %177 in 0 : vector<2x32xf32>, vector<2x32xf32>, vector<2x32xf32>, vector<2x32xf32>, vector<2x32xf32>, vector<2x32xf32>, vector<2x32xf32> -> vector<14x32xf32>
    %c0_36 = arith.constant 0 : index
    %c0_37 = arith.constant 0 : index
    %179 = vector.load %arg8[%c0_36, %c0_37] : memref<32x128xf32, #tpu.memory_space<vmem>>, vector<32x128xf32>
    %cst_38 = arith.constant dense<0.000000e+00> : vector<14x128xf32>
    %180 = tpu.matmul %178, %179, %cst_38 {dimension_numbers = #tpu.dot_dimension_numbers<[1], [0], [0], [1], [0, 0, 1, 1], [], []>} : vector<14x32xf32>, vector<32x128xf32>, vector<14x128xf32> -> vector<14x128xf32>
    %c0_39 = arith.constant 0 : index
    %c0_40 = arith.constant 0 : index
    %181 = vector.load %arg9[%c0_39, %c0_40] : memref<1x128xf32, #tpu.memory_space<vmem>>, vector<1x128xf32>
    %182 = vector.broadcast %181 : vector<1x128xf32> to vector<14x128xf32>
    %183 = arith.addf %180, %182 : vector<14x128xf32>
    %cst_41 = arith.constant 0.000000e+00 : f32
    %184 = vector.broadcast %cst_41 : f32 to vector<14x128xf32>
    %185 = arith.maximumf %183, %184 : vector<14x128xf32>
    %c0_42 = arith.constant 0 : index
    %c0_43 = arith.constant 0 : index
    %186 = vector.load %arg10[%c0_42, %c0_43] : memref<128x128xf32, #tpu.memory_space<vmem>>, vector<128x128xf32>
    %cst_44 = arith.constant dense<0.000000e+00> : vector<14x128xf32>
    %187 = tpu.matmul %185, %186, %cst_44 {dimension_numbers = #tpu.dot_dimension_numbers<[1], [0], [0], [1], [0, 0, 1, 1], [], []>} : vector<14x128xf32>, vector<128x128xf32>, vector<14x128xf32> -> vector<14x128xf32>
    %c0_45 = arith.constant 0 : index
    %c0_46 = arith.constant 0 : index
    %188 = vector.load %arg11[%c0_45, %c0_46] : memref<1x128xf32, #tpu.memory_space<vmem>>, vector<1x128xf32>
    %189 = vector.broadcast %188 : vector<1x128xf32> to vector<14x128xf32>
    %190 = arith.addf %187, %189 : vector<14x128xf32>
    %c0_47 = arith.constant 0 : index
    %c0_48 = arith.constant 0 : index
    %191 = vector.load %arg12[%c0_47, %c0_48] : memref<14x128xf32, #tpu.memory_space<vmem>>, vector<14x128xf32>
    tpu.vector_store %arg12[%c0_47, %c0_48], %190 {strides = array<i32>} : memref<14x128xf32, #tpu.memory_space<vmem>>, vector<14x128xf32>,
    return
  }
}

</mosaic_0001>

<llo_original>
// kernel: lstm_model_forward.1
$region0: #{lstm_model_forward.1}
  #allocation0 [shape = 'u32[]', space=smem, size = 0x4, offset = 0x4, fixed_abs, tag = 'smem constant byte address 0x4 - core index']
  #allocation1 [shape = 'u32[72,128]{1,0:T(1,128)}', space=vmem, size = 0x9000, scoped, tag = 'internal scratch']
  #allocation2 [shape = 'f32[32,1920]{1,0:T(8,128)}', space=vmem, size = 0x3c000, scoped, tag = 'scratch operand']
  #allocation3 [shape = 's32[1]{0}', space=sflag, size = 0x4, scoped, tag = 'scratch operand']
  #allocation6 [shape = 's32[]', space=sflag, size = 0x4, offset = 0, fixed_abs, tag = 'sflag constant byte address 0x0 - dummy sync flag']
  #allocation7 [shape = 's32[]', space=sflag, size = 0x4, offset = 0, fixed_abs, tag = 'sflag constant byte address 0x0 - dummy sync flag']
  #allocation8 [shape = 'u32[]', space=smem, size = 0x4, offset = 0x44, fixed_abs, tag = 'smem constant byte address 0x44 - assertion arg 0']
  #allocation9 [shape = 'u32[]', space=smem, size = 0x4, offset = 0x48, fixed_abs, tag = 'smem constant byte address 0x48 - assertion arg 1']
  %s0 = inlined_call_operand.vmem [shape: f32[2,1920], index: 0, kind: input, shape index: {}]
  %s1 = inlined_call_operand.vmem [shape: s32[1,14], index: 1, kind: input, shape index: {}]
  %s2 = inlined_call_operand.hbm [shape: f32[32,1920], index: 2, kind: input, shape index: {}]
  %s3 = inlined_call_operand.vmem [shape: f32[1,32], index: 3, kind: input, shape index: {}]
  %s4 = inlined_call_operand.vmem [shape: f32[64,32], index: 4, kind: input, shape index: {}]
  %s5 = inlined_call_operand.vmem [shape: f32[32,128], index: 5, kind: input, shape index: {}]
  %s6 = inlined_call_operand.vmem [shape: f32[32,128], index: 6, kind: input, shape index: {}]
  %s7 = inlined_call_operand.vmem [shape: f32[1,128], index: 7, kind: input, shape index: {}]
  %s8 = inlined_call_operand.vmem [shape: f32[32,128], index: 8, kind: input, shape index: {}]
  %s9 = inlined_call_operand.vmem [shape: f32[1,128], index: 9, kind: input, shape index: {}]
  %s10 = inlined_call_operand.hbm [shape: f32[128,128], index: 10, kind: input, shape index: {}]
  %s11 = inlined_call_operand.vmem [shape: f32[1,128], index: 11, kind: input, shape index: {}]
  %s12 = inlined_call_operand.vmem [shape: f32[14,128], index: 12, kind: output, shape index: {}]
  %s13 = sld [smem:[#allocation0]]
  $region62: #{lstm_model_forward.1} parent=0
    _
  %s15 = ssub.s32 1, %s13
  %s16 = scalar_select 0, %s15, %s13
  $region1: #{lstm_model_forward.1} parent=0
    #allocation4 [shape = 'u8[65536]{0}', space=vmem, size = 0x10000, scoped, tag = 'input window, operand 10, single buffered']
    #allocation5 [shape = 's32[1]{0}', space=sflag, size = 0x4, scoped, tag = 'scoped memory for lstm_model_forward.1']
    %17 = vsyncpa [#allocation5], 0
    // Predicated region
    $region2: #{lstm_model_forward.1} parent=1 // pred_check
      _
    $region3: #{lstm_model_forward.1} parent=1 // pred_check_branch
      %19 = sbr.rel (0) target = $region5
    $region4: #{lstm_model_forward.1} parent=1 // pred_region
      _
    $region5: #{lstm_model_forward.1} parent=1 // pred_fallthru
      _
    // Predicated region
    $region6: #{lstm_model_forward.1} parent=1 // pred_check
      _
    $region7: #{lstm_model_forward.1} parent=1 // pred_check_branch
      %21 = sbr.rel (0) target = $region9
    $region8: #{lstm_model_forward.1} parent=1 // pred_region
      _
    $region9: #{lstm_model_forward.1} parent=1 // pred_fallthru
      _
    // Predicated region
    $region10: #{lstm_model_forward.1} parent=1 // pred_check
      _
    $region11: #{lstm_model_forward.1} parent=1 // pred_check_branch
      %23 = sbr.rel (0) target = $region13
    $region12: #{lstm_model_forward.1} parent=1 // pred_region
      _
    $region13: #{lstm_model_forward.1} parent=1 // pred_fallthru
      _
    // Predicated region
    $region14: #{lstm_model_forward.1} parent=1 // pred_check
      _
    $region15: #{lstm_model_forward.1} parent=1 // pred_check_branch
      %25 = sbr.rel (0) target = $region17
    $region16: #{lstm_model_forward.1} parent=1 // pred_region
      _
    $region17: #{lstm_model_forward.1} parent=1 // pred_fallthru
      _
    // Predicated region
    $region18: #{lstm_model_forward.1} parent=1 // pred_check
      _
    $region19: #{lstm_model_forward.1} parent=1 // pred_check_branch
      %27 = sbr.rel (0) target = $region21
    $region20: #{lstm_model_forward.1} parent=1 // pred_region
      _
    $region21: #{lstm_model_forward.1} parent=1 // pred_fallthru
      _
    // Predicated region
    $region22: #{lstm_model_forward.1} parent=1 // pred_check
      _
    $region23: #{lstm_model_forward.1} parent=1 // pred_check_branch
      %29 = sbr.rel (0) target = $region25
    $region24: #{lstm_model_forward.1} parent=1 // pred_region
      _
    $region25: #{lstm_model_forward.1} parent=1 // pred_fallthru
      _
    // Predicated region
    $region26: #{lstm_model_forward.1} parent=1 // pred_check
      _
    $region27: #{lstm_model_forward.1} parent=1 // pred_check_branch
      %31 = sbr.rel (0) target = $region29
    $region28: #{lstm_model_forward.1} parent=1 // pred_region
      _
    $region29: #{lstm_model_forward.1} parent=1 // pred_fallthru
      _
    // Predicated region
    $region30: #{lstm_model_forward.1} parent=1 // pred_check
      _
    $region31: #{lstm_model_forward.1} parent=1 // pred_check_branch
      %33 = sbr.rel (0) target = $region33
    $region32: #{lstm_model_forward.1} parent=1 // pred_region
      _
    $region33: #{lstm_model_forward.1} parent=1 // pred_fallthru
      _
    // Predicated region
    $region34: #{lstm_model_forward.1} parent=1 // pred_check
      _
    $region35: #{lstm_model_forward.1} parent=1 // pred_check_branch
      %35 = sbr.rel (0) target = $region37
    $region36: #{lstm_model_forward.1} parent=1 // pred_region
      _
    $region37: #{lstm_model_forward.1} parent=1 // pred_fallthru
      _
    // Predicated region
    $region38: #{lstm_model_forward.1} parent=1 // pred_check
      _
    $region39: #{lstm_model_forward.1} parent=1 // pred_check_branch
      %37 = sbr.rel (0) target = $region41
    $region40: #{lstm_model_forward.1} parent=1 // pred_region
      %39 = vsyncadd [#allocation5], 0
      %s40 = sshll.u32 %s10, 4
      %s41 = int_to_ptr.hbm [resolvable:$true] %s40
      %s42 = sshll.u32 [#allocation4], 4
      %s43 = int_to_ptr.vmem [resolvable:$true] %s42
      %48 = dma.hbm_to_vmem [thread:$0]  %s41, 2048, %s43, [#allocation5], 128, 128, 8
    $region41: #{lstm_model_forward.1} parent=1 // pred_fallthru
      _
    // Predicated region
    $region42: #{lstm_model_forward.1} parent=1 // pred_check
      _
    $region43: #{lstm_model_forward.1} parent=1 // pred_check_branch
      %50 = sbr.rel (0) target = $region45
    $region44: #{lstm_model_forward.1} parent=1 // pred_region
      _
    $region45: #{lstm_model_forward.1} parent=1 // pred_fallthru
      _
    // Predicated region
    $region46: #{lstm_model_forward.1} parent=1 // pred_check
      _
    $region47: #{lstm_model_forward.1} parent=1 // pred_check_branch
      %52 = sbr.rel (0) target = $region49
    $region48: #{lstm_model_forward.1} parent=1 // pred_region
      %54 = dma.done [#allocation5], 2048
    $region49: #{lstm_model_forward.1} parent=1 // pred_fallthru
      _
    // Predicated region
    $region50: #{lstm_model_forward.1} parent=1 // pred_check
      _
    $region51: #{lstm_model_forward.1} parent=1 // pred_check_branch
      %56 = sbr.rel target = $region53
    $region52: #{lstm_model_forward.1} parent=1 // pred_region
      %57 = sst [smem:[#allocation8]] [#allocation7]
      %58 = sst [smem:[#allocation9]] [#allocation6]
    $region53: #{lstm_model_forward.1} parent=1 // pred_fallthru
      _
    %60 = shalt.err (0)
    %s62 = sshll.u32 %s2, 4
    %s63 = int_to_ptr.hbm [resolvable:$true] %s62
    %s64 = sshll.u32 [#allocation2], 4
    %s65 = int_to_ptr.vmem [resolvable:$true] %s64
    %67 = dma.hbm_to_vmem [thread:$0]  %s63, 7680, %s65, [#allocation3]
    %v68 = vld [vmem:[%s1] sm:$0x1]
    %v69 = vlaneseq
    %v70 = vshrl.u32 %v69, 7
    %v71 = vadd.s32 %v70, 8
    %v72 = vadd.s32 %v70, 16
    %v73 = vadd.s32 %v70, 24
    %v74 = vadd.s32 %v70, 32
    %v75 = vadd.s32 %v70, 40
    %v76 = vadd.s32 %v70, 48
    %v77 = vadd.s32 %v70, 56
    %v78 = vperm.slane %v68, 0
    %vm79 = vcmp.eq.s32.totalorder %v78, %v70
    %vm80 = vcmp.eq.s32.totalorder %v78, %v71
    %vm81 = vcmp.eq.s32.totalorder %v78, %v72
    %vm82 = vcmp.eq.s32.totalorder %v78, %v73
    %vm83 = vcmp.eq.s32.totalorder %v78, %v74
    %vm84 = vcmp.eq.s32.totalorder %v78, %v75
    %vm85 = vcmp.eq.s32.totalorder %v78, %v76
    %vm86 = vcmp.eq.s32.totalorder %v78, %v77
    %v87 = vsel %vm79, 1, 0
    %v88 = vsel %vm80, 1, 0
    %v89 = vsel %vm81, 1, 0
    %v90 = vsel %vm82, 1, 0
    %v91 = vsel %vm83, 1, 0
    %v92 = vsel %vm84, 1, 0
    %v93 = vsel %vm85, 1, 0
    %v94 = vsel %vm86, 1, 0
    %v95 = vcvt.s32.f32 %v87
    %v96 = vcvt.s32.f32 %v88
    %v97 = vcvt.s32.f32 %v89
    %v98 = vcvt.s32.f32 %v90
    %v99 = vcvt.s32.f32 %v91
    %v100 = vcvt.s32.f32 %v92
    %v101 = vcvt.s32.f32 %v93
    %v102 = vcvt.s32.f32 %v94
    %103 = vxpose.xlu0.b32.start [1/16] %v95, 128
    %104 = vxpose.xlu0.b32.cont [2/16] %v96, 128
    %105 = vxpose.xlu0.b32.cont [3/16] %v97, 128
    %106 = vxpose.xlu0.b32.cont [4/16] %v98, 128
    %107 = vxpose.xlu0.b32.cont [5/16] %v99, 128
    %108 = vxpose.xlu0.b32.cont [6/16] %v100, 128
    %109 = vxpose.xlu0.b32.cont [7/16] %v101, 128
    %110 = vxpose.xlu0.b32.cont [8/16] %v102, 128
    %111 = vxpose.xlu0.b32.cont [9/16] 0.0, 128
    %112 = vxpose.xlu0.b32.cont [10/16] 0.0, 128
    %113 = vxpose.xlu0.b32.cont [11/16] 0.0, 128
    %114 = vxpose.xlu0.b32.cont [12/16] 0.0, 128
    %115 = vxpose.xlu0.b32.cont [13/16] 0.0, 128
    %116 = vxpose.xlu0.b32.cont [14/16] 0.0, 128
    %117 = vxpose.xlu0.b32.cont [15/16] 0.0, 128
    %118 = vxpose.xlu0.b32.end [16/16] 0.0, 128
    %v119 = vpop.trf.xlu0
    %v120 = vpop.trf.xlu0
    %v121 = vpop.trf.xlu0
    %v122 = vpop.trf.xlu0
    %v123 = vpop.trf.xlu0
    %v124 = vpop.trf.xlu0
    %v125 = vpop.trf.xlu0
    %v126 = vpop.trf.xlu0
    %v127 = vpop.trf.xlu0
    %v128 = vpop.trf.xlu0
    %v129 = vpop.trf.xlu0
    %v130 = vpop.trf.xlu0
    %v131 = vpop.trf.xlu0
    %v132 = vpop.trf.xlu0
    %v133 = vpop.trf.xlu0
    %v134 = vpop.trf.xlu0
    %v135 = vld [vmem:[%s4] sm:$0xff]
    %v136 = vld [vmem:[%s4 + $0x8] sm:$0xff]
    %v137 = vld [vmem:[%s4 + $0x10] sm:$0xff]
    %v138 = vld [vmem:[%s4 + $0x18] sm:$0xff]
    %v139 = vld [vmem:[%s4 + $0x20] sm:$0xff]
    %v140 = vld [vmem:[%s4 + $0x28] sm:$0xff]
    %v141 = vld [vmem:[%s4 + $0x30] sm:$0xff]
    %v142 = vld [vmem:[%s4 + $0x38] sm:$0xff]
    %vm143 = vcmask 523264
    %v145 = vsel %vm143, %v119, 0
    %v148 = vsel %vm143, %v120, 0
    %150 = vmatpush.msra.mxu0 0.0
    %151 = vmatpush.msra.mxu0 0.0
    %152 = vmatpush.msra.mxu0 0.0
    %153 = vmatpush.msra.mxu0 0.0
    %154 = vmatpush.msra.mxu0 0.0
    %155 = vmatpush.msra.mxu0 0.0
    %156 = vmatpush.msra.mxu0 0.0
    %157 = vmatpush.msra.mxu0 0.0
    %158 = vmatpush.msra.mxu0 %v142
    %159 = vmatpush.msra.mxu0 %v141
    %160 = vmatpush.msra.mxu0 %v140
    %161 = vmatpush.msra.mxu0 %v139
    %162 = vmatpush.msra.mxu0 %v138
    %163 = vmatpush.msra.mxu0 %v137
    %164 = vmatpush.msra.mxu0 %v136
    %165 = vmatpush.msra.mxu0 %v135
    %166 = vmatmul.f32.gmra.mxu0 %v145
    %v167 = vpop.f32.mrf.mxu0
    %v168 = vadd.f32 0.0, %v167
    %169 = vmatmul.f32.gmra.mxu0 %v148
    %v170 = vpop.f32.mrf.mxu0
    %v171 = vadd.f32 0.0, %v170
    %172 = vdwg.mxu0
    %s173 = smul.u32 8, 4
    %s174 = smul.u32 %s173, 15
    %s175 = sshll.u32 %s174, 4
    %176 = dma.done [#allocation3], %s175
    %v177 = vld [vmem:[%s0] sm:$0xff]
    %v178 = vld [vmem:[%s0 + $0x8] sm:$0xff]
    %v179 = vld [vmem:[%s0 + $0x10] sm:$0xff]
    %v180 = vld [vmem:[%s0 + $0x18] sm:$0x3f]
    %v181 = vld [vmem:[#allocation2] sm:$0xff]
    %v182 = vld [vmem:[#allocation2 + $0x8] sm:$0xff]
    %v183 = vld [vmem:[#allocation2 + $0x10] sm:$0xff]
    %v184 = vld [vmem:[#allocation2 + $0x18] sm:$0xff]
    %v185 = vld [vmem:[#allocation2 + $0x20] sm:$0xff]
    %v186 = vld [vmem:[#allocation2 + $0x28] sm:$0xff]
    %v187 = vld [vmem:[#allocation2 + $0x30] sm:$0xff]
    %v188 = vld [vmem:[#allocation2 + $0x38] sm:$0xff]
    %v189 = vld [vmem:[#allocation2 + $0x40] sm:$0xff]
    %v190 = vld [vmem:[#allocation2 + $0x48] sm:$0xff]
    %v191 = vld [vmem:[#allocation2 + $0x50] sm:$0xff]
    %v192 = vld [vmem:[#allocation2 + $0x58] sm:$0xff]
    %v193 = vld [vmem:[#allocation2 + $0x60] sm:$0xff]
    %v194 = vld [vmem:[#allocation2 + $0x68] sm:$0xff]
    %v195 = vld [vmem:[#allocation2 + $0x70] sm:$0xff]
    %v196 = vld [vmem:[#allocation2 + $0x78] sm:$0xff]
    %v197 = vld [vmem:[#allocation2 + $0x80] sm:$0xff]
    %v198 = vld [vmem:[#allocation2 + $0x88] sm:$0xff]
    %v199 = vld [vmem:[#allocation2 + $0x90] sm:$0xff]
    %v200 = vld [vmem:[#allocation2 + $0x98] sm:$0xff]
    %v201 = vld [vmem:[#allocation2 + $0xa0] sm:$0xff]
    %v202 = vld [vmem:[#allocation2 + $0xa8] sm:$0xff]
    %v203 = vld [vmem:[#allocation2 + $0xb0] sm:$0xff]
    %v204 = vld [vmem:[#allocation2 + $0xb8] sm:$0xff]
    %v205 = vld [vmem:[#allocation2 + $0xc0] sm:$0xff]
    %v206 = vld [vmem:[#allocation2 + $0xc8] sm:$0xff]
    %v207 = vld [vmem:[#allocation2 + $0xd0] sm:$0xff]
    %v208 = vld [vmem:[#allocation2 + $0xd8] sm:$0xff]
    %v209 = vld [vmem:[#allocation2 + $0xe0] sm:$0xff]
    %v210 = vld [vmem:[#allocation2 + $0xe8] sm:$0xff]
    %v211 = vld [vmem:[#allocation2 + $0xf0] sm:$0xff]
    %v212 = vld [vmem:[#allocation2 + $0xf8] sm:$0xff]
    %v213 = vld [vmem:[#allocation2 + $0x100] sm:$0xff]
    %v214 = vld [vmem:[#allocation2 + $0x108] sm:$0xff]
    %v215 = vld [vmem:[#allocation2 + $0x110] sm:$0xff]
    %v216 = vld [vmem:[#allocation2 + $0x118] sm:$0xff]
    %v217 = vld [vmem:[#allocation2 + $0x120] sm:$0xff]
    %v218 = vld [vmem:[#allocation2 + $0x128] sm:$0xff]
    %v219 = vld [vmem:[#allocation2 + $0x130] sm:$0xff]
    %v220 = vld [vmem:[#allocation2 + $0x138] sm:$0xff]
    %v221 = vld [vmem:[#allocation2 + $0x140] sm:$0xff]
    %v222 = vld [vmem:[#allocation2 + $0x148] sm:$0xff]
    %v223 = vld [vmem:[#allocation2 + $0x150] sm:$0xff]
    %v224 = vld [vmem:[#allocation2 + $0x158] sm:$0xff]
    %v225 = vld [vmem:[#allocation2 + $0x160] sm:$0xff]
    %v226 = vld [vmem:[#allocation2 + $0x168] sm:$0xff]
    %v227 = vld [vmem:[#allocation2 + $0x170] sm:$0xff]
    %v228 = vld [vmem:[#allocation2 + $0x178] sm:$0xff]
    %v229 = vld [vmem:[#allocation2 + $0x180] sm:$0xff]
    %v230 = vld [vmem:[#allocation2 + $0x188] sm:$0xff]
    %v231 = vld [vmem:[#allocation2 + $0x190] sm:$0xff]
    %v232 = vld [vmem:[#allocation2 + $0x198] sm:$0xff]
    %v233 = vld [vmem:[#allocation2 + $0x1a0] sm:$0xff]
    %v234 = vld [vmem:[#allocation2 + $0x1a8] sm:$0xff]
    %v235 = vld [vmem:[#allocation2 + $0x1b0] sm:$0xff]
    %v236 = vld [vmem:[#allocation2 + $0x1b8] sm:$0xff]
    %v237 = vld [vmem:[#allocation2 + $0x1c0] sm:$0xff]
    %v238 = vld [vmem:[#allocation2 + $0x1c8] sm:$0xff]
    %v239 = vld [vmem:[#allocation2 + $0x1d0] sm:$0xff]
    %v240 = vld [vmem:[#allocation2 + $0x1d8] sm:$0xff]
    %v241 = vld [vmem:[%s3] sm:$0x1]
    %v243 = vperm.slane %v241, 0
    %249 = vst [vmem:[#allocation1] ss:$4 sm:$0xff] %v177
    %s250 = scalar_lea.vmem [#allocation1], 32
    %251 = vst [vmem:[%s250] ss:$4 sm:$0xff] %v178
    %v252 = vld.sshfl [vmem:[#allocation1] sm:$0xff pattern:$0x73625140]
    %v253 = vld.sshfl [vmem:[#allocation1 + $0x8] sm:$0xff pattern:$0x73625140]
    %v254 = vld.sshfl [vmem:[#allocation1 + $0x10] sm:$0xff pattern:$0x73625140]
    %v255 = vld.sshfl [vmem:[#allocation1 + $0x18] sm:$0xff pattern:$0x73625140]
    %v256 = vld.sshfl [vmem:[#allocation1 + $0x20] sm:$0xff pattern:$0x73625140]
    %v257 = vld.sshfl [vmem:[#allocation1 + $0x28] sm:$0xff pattern:$0x73625140]
    %v258 = vld.sshfl [vmem:[#allocation1 + $0x30] sm:$0xff pattern:$0x73625140]
    %v259 = vld.sshfl [vmem:[#allocation1 + $0x38] sm:$0xff pattern:$0x73625140]
    %260 = vst [vmem:[#allocation1] ss:$4 sm:$0xff] %v179
    %261 = vst [vmem:[%s250] ss:$4 sm:$0xff] %v180
    %v262 = vld.sshfl [vmem:[#allocation1] sm:$0xff pattern:$0x73625140]
    %v263 = vld.sshfl [vmem:[#allocation1 + $0x8] sm:$0xff pattern:$0x73625140]
    %v264 = vld.sshfl [vmem:[#allocation1 + $0x10] sm:$0xff pattern:$0x73625140]
    %v265 = vld.sshfl [vmem:[#allocation1 + $0x18] sm:$0xff pattern:$0x73625140]
    %v266 = vld.sshfl [vmem:[#allocation1 + $0x20] sm:$0xff pattern:$0x73625140]
    %v267 = vld.sshfl [vmem:[#allocation1 + $0x28] sm:$0xff pattern:$0x73625140]
    %v268 = vld.sshfl [vmem:[#allocation1 + $0x30] sm:$0xff pattern:$0x73625140]
    %284 = vmatpush.xpose.msra.mxu0 0.0
    %285 = vmatpush.xpose.msra.mxu0 0.0
    %286 = vmatpush.xpose.msra.mxu0 0.0
    %287 = vmatpush.xpose.msra.mxu0 0.0
    %288 = vmatpush.xpose.msra.mxu0 0.0
    %289 = vmatpush.xpose.msra.mxu0 0.0
    %290 = vmatpush.xpose.msra.mxu0 0.0
    %291 = vmatpush.xpose.msra.mxu0 0.0
    %292 = vmatpush.xpose.msra.mxu0 0.0
    %293 = vmatpush.xpose.msra.mxu0 0.0
    %294 = vmatpush.xpose.msra.mxu0 0.0
    %295 = vmatpush.xpose.msra.mxu0 0.0
    %296 = vmatpush.xpose.msra.mxu0 %v226
    %297 = vmatpush.xpose.msra.mxu0 %v211
    %298 = vmatpush.xpose.msra.mxu0 %v196
    %299 = vmatpush.xpose.msra.mxu0 %v181
    %300 = vmatmul.f32.gmra.mxu0 %v252
    %v301 = vpop.f32.mrf.mxu0
    %v302 = vadd.f32 %v243, %v301
    %303 = vdwg.mxu0
    %304 = vmatpush.xpose.msra.mxu0 0.0
    %305 = vmatpush.xpose.msra.mxu0 0.0
    %306 = vmatpush.xpose.msra.mxu0 0.0
    %307 = vmatpush.xpose.msra.mxu0 0.0
    %308 = vmatpush.xpose.msra.mxu0 0.0
    %309 = vmatpush.xpose.msra.mxu0 0.0
    %310 = vmatpush.xpose.msra.mxu0 0.0
    %311 = vmatpush.xpose.msra.mxu0 0.0
    %312 = vmatpush.xpose.msra.mxu0 0.0
    %313 = vmatpush.xpose.msra.mxu0 0.0
    %314 = vmatpush.xpose.msra.mxu0 0.0
    %315 = vmatpush.xpose.msra.mxu0 0.0
    %316 = vmatpush.xpose.msra.mxu0 %v227
    %317 = vmatpush.xpose.msra.mxu0 %v212
    %318 = vmatpush.xpose.msra.mxu0 %v197
    %319 = vmatpush.xpose.msra.mxu0 %v182
    %320 = vmatmul.f32.gmra.mxu0 %v253
    %v321 = vpop.f32.mrf.mxu0
    %v322 = vadd.f32 %v302, %v321
    %323 = vdwg.mxu0
    %324 = vmatpush.xpose.msra.mxu0 0.0
    %325 = vmatpush.xpose.msra.mxu0 0.0
    %326 = vmatpush.xpose.msra.mxu0 0.0
    %327 = vmatpush.xpose.msra.mxu0 0.0
    %328 = vmatpush.xpose.msra.mxu0 0.0
    %329 = vmatpush.xpose.msra.mxu0 0.0
    %330 = vmatpush.xpose.msra.mxu0 0.0
    %331 = vmatpush.xpose.msra.mxu0 0.0
    %332 = vmatpush.xpose.msra.mxu0 0.0
    %333 = vmatpush.xpose.msra.mxu0 0.0
    %334 = vmatpush.xpose.msra.mxu0 0.0
    %335 = vmatpush.xpose.msra.mxu0 0.0
    %336 = vmatpush.xpose.msra.mxu0 %v228
    %337 = vmatpush.xpose.msra.mxu0 %v213
    %338 = vmatpush.xpose.msra.mxu0 %v198
    %339 = vmatpush.xpose.msra.mxu0 %v183
    %340 = vmatmul.f32.gmra.mxu0 %v254
    %v341 = vpop.f32.mrf.mxu0
    %v342 = vadd.f32 %v322, %v341
    %343 = vdwg.mxu0
    %344 = vmatpush.xpose.msra.mxu0 0.0
    %345 = vmatpush.xpose.msra.mxu0 0.0
    %346 = vmatpush.xpose.msra.mxu0 0.0
    %347 = vmatpush.xpose.msra.mxu0 0.0
    %348 = vmatpush.xpose.msra.mxu0 0.0
    %349 = vmatpush.xpose.msra.mxu0 0.0
    %350 = vmatpush.xpose.msra.mxu0 0.0
    %351 = vmatpush.xpose.msra.mxu0 0.0
    %352 = vmatpush.xpose.msra.mxu0 0.0
    %353 = vmatpush.xpose.msra.mxu0 0.0
    %354 = vmatpush.xpose.msra.mxu0 0.0
    %355 = vmatpush.xpose.msra.mxu0 0.0
    %356 = vmatpush.xpose.msra.mxu0 %v229
    %357 = vmatpush.xpose.msra.mxu0 %v214
    %358 = vmatpush.xpose.msra.mxu0 %v199
    %359 = vmatpush.xpose.msra.mxu0 %v184
    %360 = vmatmul.f32.gmra.mxu0 %v255
    %v361 = vpop.f32.mrf.mxu0
    %v362 = vadd.f32 %v342, %v361
    %363 = vdwg.mxu0
    %364 = vmatpush.xpose.msra.mxu0 0.0
    %365 = vmatpush.xpose.msra.mxu0 0.0
    %366 = vmatpush.xpose.msra.mxu0 0.0
    %367 = vmatpush.xpose.msra.mxu0 0.0
    %368 = vmatpush.xpose.msra.mxu0 0.0
    %369 = vmatpush.xpose.msra.mxu0 0.0
    %370 = vmatpush.xpose.msra.mxu0 0.0
    %371 = vmatpush.xpose.msra.mxu0 0.0
    %372 = vmatpush.xpose.msra.mxu0 0.0
    %373 = vmatpush.xpose.msra.mxu0 0.0
    %374 = vmatpush.xpose.msra.mxu0 0.0
    %375 = vmatpush.xpose.msra.mxu0 0.0
    %376 = vmatpush.xpose.msra.mxu0 %v230
    %377 = vmatpush.xpose.msra.mxu0 %v215
    %378 = vmatpush.xpose.msra.mxu0 %v200
    %379 = vmatpush.xpose.msra.mxu0 %v185
    %380 = vmatmul.f32.gmra.mxu0 %v256
    %v381 = vpop.f32.mrf.mxu0
    %v382 = vadd.f32 %v362, %v381
    %383 = vdwg.mxu0
    %384 = vmatpush.xpose.msra.mxu0 0.0
    %385 = vmatpush.xpose.msra.mxu0 0.0
    %386 = vmatpush.xpose.msra.mxu0 0.0
    %387 = vmatpush.xpose.msra.mxu0 0.0
    %388 = vmatpush.xpose.msra.mxu0 0.0
    %389 = vmatpush.xpose.msra.mxu0 0.0
    %390 = vmatpush.xpose.msra.mxu0 0.0
    %391 = vmatpush.xpose.msra.mxu0 0.0
    %392 = vmatpush.xpose.msra.mxu0 0.0
    %393 = vmatpush.xpose.msra.mxu0 0.0
    %394 = vmatpush.xpose.msra.mxu0 0.0
    %395 = vmatpush.xpose.msra.mxu0 0.0
    %396 = vmatpush.xpose.msra.mxu0 %v231
    %397 = vmatpush.xpose.msra.mxu0 %v216
    %398 = vmatpush.xpose.msra.mxu0 %v201
    %399 = vmatpush.xpose.msra.mxu0 %v186
    %400 = vmatmul.f32.gmra.mxu0 %v257
    %v401 = vpop.f32.mrf.mxu0
    %v402 = vadd.f32 %v382, %v401
    %403 = vdwg.mxu0
    %404 = vmatpush.xpose.msra.mxu0 0.0
    %405 = vmatpush.xpose.msra.mxu0 0.0
    %406 = vmatpush.xpose.msra.mxu0 0.0
    %407 = vmatpush.xpose.msra.mxu0 0.0
    %408 = vmatpush.xpose.msra.mxu0 0.0
    %409 = vmatpush.xpose.msra.mxu0 0.0
    %410 = vmatpush.xpose.msra.mxu0 0.0
    %411 = vmatpush.xpose.msra.mxu0 0.0
    %412 = vmatpush.xpose.msra.mxu0 0.0
    %413 = vmatpush.xpose.msra.mxu0 0.0
    %414 = vmatpush.xpose.msra.mxu0 0.0
    %415 = vmatpush.xpose.msra.mxu0 0.0
    %416 = vmatpush.xpose.msra.mxu0 %v232
    %417 = vmatpush.xpose.msra.mxu0 %v217
    %418 = vmatpush.xpose.msra.mxu0 %v202
    %419 = vmatpush.xpose.msra.mxu0 %v187
    %420 = vmatmul.f32.gmra.mxu0 %v258
    %v421 = vpop.f32.mrf.mxu0
    %v422 = vadd.f32 %v402, %v421
    %423 = vdwg.mxu0
    %424 = vmatpush.xpose.msra.mxu0 0.0
    %425 = vmatpush.xpose.msra.mxu0 0.0
    %426 = vmatpush.xpose.msra.mxu0 0.0
    %427 = vmatpush.xpose.msra.mxu0 0.0
    %428 = vmatpush.xpose.msra.mxu0 0.0
    %429 = vmatpush.xpose.msra.mxu0 0.0
    %430 = vmatpush.xpose.msra.mxu0 0.0
    %431 = vmatpush.xpose.msra.mxu0 0.0
    %432 = vmatpush.xpose.msra.mxu0 0.0
    %433 = vmatpush.xpose.msra.mxu0 0.0
    %434 = vmatpush.xpose.msra.mxu0 0.0
    %435 = vmatpush.xpose.msra.mxu0 0.0
    %436 = vmatpush.xpose.msra.mxu0 %v233
    %437 = vmatpush.xpose.msra.mxu0 %v218
    %438 = vmatpush.xpose.msra.mxu0 %v203
    %439 = vmatpush.xpose.msra.mxu0 %v188
    %440 = vmatmul.f32.gmra.mxu0 %v259
    %v441 = vpop.f32.mrf.mxu0
    %v442 = vadd.f32 %v422, %v441
    %443 = vdwg.mxu0
    %444 = vmatpush.xpose.msra.mxu0 0.0
    %445 = vmatpush.xpose.msra.mxu0 0.0
    %446 = vmatpush.xpose.msra.mxu0 0.0
    %447 = vmatpush.xpose.msra.mxu0 0.0
    %448 = vmatpush.xpose.msra.mxu0 0.0
    %449 = vmatpush.xpose.msra.mxu0 0.0
    %450 = vmatpush.xpose.msra.mxu0 0.0
    %451 = vmatpush.xpose.msra.mxu0 0.0
    %452 = vmatpush.xpose.msra.mxu0 0.0
    %453 = vmatpush.xpose.msra.mxu0 0.0
    %454 = vmatpush.xpose.msra.mxu0 0.0
    %455 = vmatpush.xpose.msra.mxu0 0.0
    %456 = vmatpush.xpose.msra.mxu0 %v234
    %457 = vmatpush.xpose.msra.mxu0 %v219
    %458 = vmatpush.xpose.msra.mxu0 %v204
    %459 = vmatpush.xpose.msra.mxu0 %v189
    %460 = vmatmul.f32.gmra.mxu0 %v262
    %v461 = vpop.f32.mrf.mxu0
    %v462 = vadd.f32 %v442, %v461
    %463 = vdwg.mxu0
    %464 = vmatpush.xpose.msra.mxu0 0.0
    %465 = vmatpush.xpose.msra.mxu0 0.0
    %466 = vmatpush.xpose.msra.mxu0 0.0
    %467 = vmatpush.xpose.msra.mxu0 0.0
    %468 = vmatpush.xpose.msra.mxu0 0.0
    %469 = vmatpush.xpose.msra.mxu0 0.0
    %470 = vmatpush.xpose.msra.mxu0 0.0
    %471 = vmatpush.xpose.msra.mxu0 0.0
    %472 = vmatpush.xpose.msra.mxu0 0.0
    %473 = vmatpush.xpose.msra.mxu0 0.0
    %474 = vmatpush.xpose.msra.mxu0 0.0
    %475 = vmatpush.xpose.msra.mxu0 0.0
    %476 = vmatpush.xpose.msra.mxu0 %v235
    %477 = vmatpush.xpose.msra.mxu0 %v220
    %478 = vmatpush.xpose.msra.mxu0 %v205
    %479 = vmatpush.xpose.msra.mxu0 %v190
    %480 = vmatmul.f32.gmra.mxu0 %v263
    %v481 = vpop.f32.mrf.mxu0
    %v482 = vadd.f32 %v462, %v481
    %483 = vdwg.mxu0
    %484 = vmatpush.xpose.msra.mxu0 0.0
    %485 = vmatpush.xpose.msra.mxu0 0.0
    %486 = vmatpush.xpose.msra.mxu0 0.0
    %487 = vmatpush.xpose.msra.mxu0 0.0
    %488 = vmatpush.xpose.msra.mxu0 0.0
    %489 = vmatpush.xpose.msra.mxu0 0.0
    %490 = vmatpush.xpose.msra.mxu0 0.0
    %491 = vmatpush.xpose.msra.mxu0 0.0
    %492 = vmatpush.xpose.msra.mxu0 0.0
    %493 = vmatpush.xpose.msra.mxu0 0.0
    %494 = vmatpush.xpose.msra.mxu0 0.0
    %495 = vmatpush.xpose.msra.mxu0 0.0
    %496 = vmatpush.xpose.msra.mxu0 %v236
    %497 = vmatpush.xpose.msra.mxu0 %v221
    %498 = vmatpush.xpose.msra.mxu0 %v206
    %499 = vmatpush.xpose.msra.mxu0 %v191
    %500 = vmatmul.f32.gmra.mxu0 %v264
    %v501 = vpop.f32.mrf.mxu0
    %v502 = vadd.f32 %v482, %v501
    %503 = vdwg.mxu0
    %504 = vmatpush.xpose.msra.mxu0 0.0
    %505 = vmatpush.xpose.msra.mxu0 0.0
    %506 = vmatpush.xpose.msra.mxu0 0.0
    %507 = vmatpush.xpose.msra.mxu0 0.0
    %508 = vmatpush.xpose.msra.mxu0 0.0
    %509 = vmatpush.xpose.msra.mxu0 0.0
    %510 = vmatpush.xpose.msra.mxu0 0.0
    %511 = vmatpush.xpose.msra.mxu0 0.0
    %512 = vmatpush.xpose.msra.mxu0 0.0
    %513 = vmatpush.xpose.msra.mxu0 0.0
    %514 = vmatpush.xpose.msra.mxu0 0.0
    %515 = vmatpush.xpose.msra.mxu0 0.0
    %516 = vmatpush.xpose.msra.mxu0 %v237
    %517 = vmatpush.xpose.msra.mxu0 %v222
    %518 = vmatpush.xpose.msra.mxu0 %v207
    %519 = vmatpush.xpose.msra.mxu0 %v192
    %520 = vmatmul.f32.gmra.mxu0 %v265
    %v521 = vpop.f32.mrf.mxu0
    %v522 = vadd.f32 %v502, %v521
    %523 = vdwg.mxu0
    %524 = vmatpush.xpose.msra.mxu0 0.0
    %525 = vmatpush.xpose.msra.mxu0 0.0
    %526 = vmatpush.xpose.msra.mxu0 0.0
    %527 = vmatpush.xpose.msra.mxu0 0.0
    %528 = vmatpush.xpose.msra.mxu0 0.0
    %529 = vmatpush.xpose.msra.mxu0 0.0
    %530 = vmatpush.xpose.msra.mxu0 0.0
    %531 = vmatpush.xpose.msra.mxu0 0.0
    %532 = vmatpush.xpose.msra.mxu0 0.0
    %533 = vmatpush.xpose.msra.mxu0 0.0
    %534 = vmatpush.xpose.msra.mxu0 0.0
    %535 = vmatpush.xpose.msra.mxu0 0.0
    %536 = vmatpush.xpose.msra.mxu0 %v238
    %537 = vmatpush.xpose.msra.mxu0 %v223
    %538 = vmatpush.xpose.msra.mxu0 %v208
    %539 = vmatpush.xpose.msra.mxu0 %v193
    %540 = vmatmul.f32.gmra.mxu0 %v266
    %v541 = vpop.f32.mrf.mxu0
    %v542 = vadd.f32 %v522, %v541
    %543 = vdwg.mxu0
    %544 = vmatpush.xpose.msra.mxu0 0.0
    %545 = vmatpush.xpose.msra.mxu0 0.0
    %546 = vmatpush.xpose.msra.mxu0 0.0
    %547 = vmatpush.xpose.msra.mxu0 0.0
    %548 = vmatpush.xpose.msra.mxu0 0.0
    %549 = vmatpush.xpose.msra.mxu0 0.0
    %550 = vmatpush.xpose.msra.mxu0 0.0
    %551 = vmatpush.xpose.msra.mxu0 0.0
    %552 = vmatpush.xpose.msra.mxu0 0.0
    %553 = vmatpush.xpose.msra.mxu0 0.0
    %554 = vmatpush.xpose.msra.mxu0 0.0
    %555 = vmatpush.xpose.msra.mxu0 0.0
    %556 = vmatpush.xpose.msra.mxu0 %v239
    %557 = vmatpush.xpose.msra.mxu0 %v224
    %558 = vmatpush.xpose.msra.mxu0 %v209
    %559 = vmatpush.xpose.msra.mxu0 %v194
    %560 = vmatmul.f32.gmra.mxu0 %v267
    %v561 = vpop.f32.mrf.mxu0
    %v562 = vadd.f32 %v542, %v561
    %563 = vdwg.mxu0
    %564 = vmatpush.xpose.msra.mxu0 0.0
    %565 = vmatpush.xpose.msra.mxu0 0.0
    %566 = vmatpush.xpose.msra.mxu0 0.0
    %567 = vmatpush.xpose.msra.mxu0 0.0
    %568 = vmatpush.xpose.msra.mxu0 0.0
    %569 = vmatpush.xpose.msra.mxu0 0.0
    %570 = vmatpush.xpose.msra.mxu0 0.0
    %571 = vmatpush.xpose.msra.mxu0 0.0
    %572 = vmatpush.xpose.msra.mxu0 0.0
    %573 = vmatpush.xpose.msra.mxu0 0.0
    %574 = vmatpush.xpose.msra.mxu0 0.0
    %575 = vmatpush.xpose.msra.mxu0 0.0
    %576 = vmatpush.xpose.msra.mxu0 %v240
    %577 = vmatpush.xpose.msra.mxu0 %v225
    %578 = vmatpush.xpose.msra.mxu0 %v210
    %579 = vmatpush.xpose.msra.mxu0 %v195
    %580 = vmatmul.f32.gmra.mxu0 %v268
    %v581 = vpop.f32.mrf.mxu0
    %v582 = vadd.f32 %v562, %v581
    %583 = vdwg.mxu0
    %v584 = vmax.f32 %v582, 0.0
    %vm587 = vcmask 1041408
    %v588 = vrot.slane %v168, 6
    %v589 = vrot.slane %v171, 6
    %v590 = vsel %vm587, %v588, %v589
    %v592 = vsel %vm587, %v584, %v588
    %v593 = vld [vmem:[%s5] sm:$0xff]
    %v594 = vld [vmem:[%s5 + $0x8] sm:$0xff]
    %v595 = vld [vmem:[%s5 + $0x10] sm:$0xff]
    %v596 = vld [vmem:[%s5 + $0x18] sm:$0xff]
    %v597 = vld [vmem:[%s7] sm:$0x1]
    %v599 = vperm.slane %v597, 0
    %vm601 = vcmask 261120
    %v603 = vsel %vm601, %v592, 0
    %v605 = vsel %vm601, %v590, 0
    %607 = vmatpush.msra.mxu0 0.0
    %608 = vmatpush.msra.mxu0 0.0
    %609 = vmatpush.msra.mxu0 0.0
    %610 = vmatpush.msra.mxu0 0.0
    %611 = vmatpush.msra.mxu0 0.0
    %612 = vmatpush.msra.mxu0 0.0
    %613 = vmatpush.msra.mxu0 0.0
    %614 = vmatpush.msra.mxu0 0.0
    %615 = vmatpush.msra.mxu0 0.0
    %616 = vmatpush.msra.mxu0 0.0
    %617 = vmatpush.msra.mxu0 0.0
    %618 = vmatpush.msra.mxu0 0.0
    %619 = vmatpush.msra.mxu0 %v596
    %620 = vmatpush.msra.mxu0 %v595
    %621 = vmatpush.msra.mxu0 %v594
    %622 = vmatpush.msra.mxu0 %v593
    %623 = vmatmul.f32.gmra.mxu0 %v603
    %v624 = vpop.f32.mrf.mxu0
    %v625 = vadd.f32 %v599, %v624
    %626 = vmatmul.f32.gmra.mxu0 %v605
    %v627 = vpop.f32.mrf.mxu0
    %v628 = vadd.f32 %v599, %v627
    %629 = vdwg.mxu0
    %v630 = vld [vmem:[%s6] sm:$0xff]
    %v631 = vld [vmem:[%s6 + $0x8] sm:$0xff]
    %v632 = vld [vmem:[%s6 + $0x10] sm:$0xff]
    %v633 = vld [vmem:[%s6 + $0x18] sm:$0xff]
    %v635 = vsel %vm601, 0.0, 0
    %637 = vmatpush.msra.mxu0 0.0
    %638 = vmatpush.msra.mxu0 0.0
    %639 = vmatpush.msra.mxu0 0.0
    %640 = vmatpush.msra.mxu0 0.0
    %641 = vmatpush.msra.mxu0 0.0
    %642 = vmatpush.msra.mxu0 0.0
    %643 = vmatpush.msra.mxu0 0.0
    %644 = vmatpush.msra.mxu0 0.0
    %645 = vmatpush.msra.mxu0 0.0
    %646 = vmatpush.msra.mxu0 0.0
    %647 = vmatpush.msra.mxu0 0.0
    %648 = vmatpush.msra.mxu0 0.0
    %649 = vmatpush.msra.mxu0 %v633
    %650 = vmatpush.msra.mxu0 %v632
    %651 = vmatpush.msra.mxu0 %v631
    %652 = vmatpush.msra.mxu0 %v630
    %653 = vmatmul.f32.gmra.mxu0 %v635
    %v654 = vpop.f32.mrf.mxu0
    %v655 = vadd.f32 0.0, %v654
    %656 = vdwg.mxu0
    %v657 = vadd.f32 %v625, %v655
    %v658 = vxor.u32 %v657, 2147483648
    %v659 = vmul.f32 %v658, 1.442695
    %v660 = vpow.pop %v659
    %v661 = vadd.f32 %v660, 1.0
    %v662 = vrcp.pop %v661
    %v663 = vmul.f32 %v661, %v662
    %v664 = vsub.f32 1.0, %v663
    %v665 = vmul.f32 %v662, %v664
    %v666 = vadd.f32 %v662, %v665
    %vm667 = vweird.f32 %v661
    %vm668 = vweird.f32 %v662
    %vm669 = vmor %vm667, %vm668
    %v670 = vsel %vm669, %v662, %v666
    %v671 = vand.u32 2147483647, %v661
    %vm672 = vcmp.eq.f32.partialorder %v671, 8.507059e+37
    %v673 = vand.u32 %v661, 2147483648
    %v674 = vor.u32 1.1754944e-38, %v673
    %v675 = vsel %vm672, %v674, %v670
    %v676 = vmul.f32 1.0, %v675
    %v677 = vtanh.pop %v657
    %v678 = vmul.f32 %v676, 0.0
    %680 = vrot.lane.b32.xlu0 %v677, 32
    %v681 = vpop.permute.xlu0 %680
    %v683 = vmul.f32 %v676, %v681
    %685 = vrot.lane.b32.xlu0 %v683, 32
    %v686 = vpop.permute.xlu0 %685
    %v688 = vadd.f32 %v678, %v686
    %v689 = vtanh.pop %v688
    %691 = vrot.lane.b32.xlu0 %v689, 32
    %v692 = vpop.permute.xlu0 %691
    %v694 = vmul.f32 %v676, %v692
    %696 = vrot.lane.b32.xlu0 %v694, 64
    %v697 = vpop.permute.xlu0 %696
    %v698 = vsel %vm601, %v697, 0
    %700 = vmatpush.msra.mxu0 0.0
    %701 = vmatpush.msra.mxu0 0.0
    %702 = vmatpush.msra.mxu0 0.0
    %703 = vmatpush.msra.mxu0 0.0
    %704 = vmatpush.msra.mxu0 0.0
    %705 = vmatpush.msra.mxu0 0.0
    %706 = vmatpush.msra.mxu0 0.0
    %707 = vmatpush.msra.mxu0 0.0
    %708 = vmatpush.msra.mxu0 0.0
    %709 = vmatpush.msra.mxu0 0.0
    %710 = vmatpush.msra.mxu0 0.0
    %711 = vmatpush.msra.mxu0 0.0
    %712 = vmatpush.msra.mxu0 %v633
    %713 = vmatpush.msra.mxu0 %v632
    %714 = vmatpush.msra.mxu0 %v631
    %715 = vmatpush.msra.mxu0 %v630
    %716 = vmatmul.f32.gmra.mxu0 %v698
    %v717 = vpop.f32.mrf.mxu0
    %v718 = vadd.f32 0.0, %v717
    %719 = vdwg.mxu0
    %v721 = vrot.slane %v718, 6
    %v723 = vadd.f32 %v625, %v721
    %v724 = vxor.u32 %v723, 2147483648
    %v725 = vmul.f32 %v724, 1.442695
    %v726 = vpow.pop %v725
    %v727 = vadd.f32 %v726, 1.0
    %v728 = vrcp.pop %v727
    %v729 = vmul.f32 %v727, %v728
    %v730 = vsub.f32 1.0, %v729
    %v731 = vmul.f32 %v728, %v730
    %v732 = vadd.f32 %v728, %v731
    %vm733 = vweird.f32 %v727
    %vm734 = vweird.f32 %v728
    %vm735 = vmor %vm733, %vm734
    %v736 = vsel %vm735, %v728, %v732
    %v737 = vand.u32 2147483647, %v727
    %vm738 = vcmp.eq.f32.partialorder %v737, 8.507059e+37
    %v739 = vand.u32 %v727, 2147483648
    %v740 = vor.u32 1.1754944e-38, %v739
    %v741 = vsel %vm738, %v740, %v736
    %v742 = vmul.f32 1.0, %v741
    %v743 = vtanh.pop %v723
    %v745 = vrot.slane %v688, 6
    %v747 = vmul.f32 %v742, %v745
    %749 = vrot.lane.b32.xlu0 %v743, 32
    %v750 = vpop.permute.xlu0 %749
    %v752 = vmul.f32 %v742, %v750
    %754 = vrot.lane.b32.xlu0 %v752, 32
    %v755 = vpop.permute.xlu0 %754
    %v757 = vadd.f32 %v747, %v755
    %v758 = vtanh.pop %v757
    %760 = vrot.lane.b32.xlu0 %v758, 32
    %v761 = vpop.permute.xlu0 %760
    %v763 = vmul.f32 %v742, %v761
    %v765 = vrot.slane %v763, 2
    %766 = vrot.lane.b32.xlu0 %v765, 64
    %v767 = vpop.permute.xlu0 %766
    %v768 = vsel %vm601, %v767, 0
    %770 = vmatpush.msra.mxu0 0.0
    %771 = vmatpush.msra.mxu0 0.0
    %772 = vmatpush.msra.mxu0 0.0
    %773 = vmatpush.msra.mxu0 0.0
    %774 = vmatpush.msra.mxu0 0.0
    %775 = vmatpush.msra.mxu0 0.0
    %776 = vmatpush.msra.mxu0 0.0
    %777 = vmatpush.msra.mxu0 0.0
    %778 = vmatpush.msra.mxu0 0.0
    %779 = vmatpush.msra.mxu0 0.0
    %780 = vmatpush.msra.mxu0 0.0
    %781 = vmatpush.msra.mxu0 0.0
    %782 = vmatpush.msra.mxu0 %v633
    %783 = vmatpush.msra.mxu0 %v632
    %784 = vmatpush.msra.mxu0 %v631
    %785 = vmatpush.msra.mxu0 %v630
    %786 = vmatmul.f32.gmra.mxu0 %v768
    %v787 = vpop.f32.mrf.mxu0
    %v788 = vadd.f32 0.0, %v787
    %789 = vdwg.mxu0
    %v791 = vrot.slane %v788, 4
    %v793 = vadd.f32 %v625, %v791
    %v794 = vxor.u32 %v793, 2147483648
    %v795 = vmul.f32 %v794, 1.442695
    %v796 = vpow.pop %v795
    %v797 = vadd.f32 %v796, 1.0
    %v798 = vrcp.pop %v797
    %v799 = vmul.f32 %v797, %v798
    %v800 = vsub.f32 1.0, %v799
    %v801 = vmul.f32 %v798, %v800
    %v802 = vadd.f32 %v798, %v801
    %vm803 = vweird.f32 %v797
    %vm804 = vweird.f32 %v798
    %vm805 = vmor %vm803, %vm804
    %v806 = vsel %vm805, %v798, %v802
    %v807 = vand.u32 2147483647, %v797
    %vm808 = vcmp.eq.f32.partialorder %v807, 8.507059e+37
    %v809 = vand.u32 %v797, 2147483648
    %v810 = vor.u32 1.1754944e-38, %v809
    %v811 = vsel %vm808, %v810, %v806
    %v812 = vmul.f32 1.0, %v811
    %v813 = vtanh.pop %v793
    %v815 = vrot.slane %v757, 6
    %v817 = vmul.f32 %v812, %v815
    %819 = vrot.lane.b32.xlu0 %v813, 32
    %v820 = vpop.permute.xlu0 %819
    %v822 = vmul.f32 %v812, %v820
    %824 = vrot.lane.b32.xlu0 %v822, 32
    %v825 = vpop.permute.xlu0 %824
    %v827 = vadd.f32 %v817, %v825
    %v828 = vtanh.pop %v827
    %830 = vrot.lane.b32.xlu0 %v828, 32
    %v831 = vpop.permute.xlu0 %830
    %v833 = vmul.f32 %v812, %v831
    %v835 = vrot.slane %v833, 4
    %836 = vrot.lane.b32.xlu0 %v835, 64
    %v837 = vpop.permute.xlu0 %836
    %v838 = vsel %vm601, %v837, 0
    %840 = vmatpush.msra.mxu0 0.0
    %841 = vmatpush.msra.mxu0 0.0
    %842 = vmatpush.msra.mxu0 0.0
    %843 = vmatpush.msra.mxu0 0.0
    %844 = vmatpush.msra.mxu0 0.0
    %845 = vmatpush.msra.mxu0 0.0
    %846 = vmatpush.msra.mxu0 0.0
    %847 = vmatpush.msra.mxu0 0.0
    %848 = vmatpush.msra.mxu0 0.0
    %849 = vmatpush.msra.mxu0 0.0
    %850 = vmatpush.msra.mxu0 0.0
    %851 = vmatpush.msra.mxu0 0.0
    %852 = vmatpush.msra.mxu0 %v633
    %853 = vmatpush.msra.mxu0 %v632
    %854 = vmatpush.msra.mxu0 %v631
    %855 = vmatpush.msra.mxu0 %v630
    %856 = vmatmul.f32.gmra.mxu0 %v838
    %v857 = vpop.f32.mrf.mxu0
    %v858 = vadd.f32 0.0, %v857
    %859 = vdwg.mxu0
    %v861 = vrot.slane %v858, 2
    %v863 = vadd.f32 %v625, %v861
    %v864 = vxor.u32 %v863, 2147483648
    %v865 = vmul.f32 %v864, 1.442695
    %v866 = vpow.pop %v865
    %v867 = vadd.f32 %v866, 1.0
    %v868 = vrcp.pop %v867
    %v869 = vmul.f32 %v867, %v868
    %v870 = vsub.f32 1.0, %v869
    %v871 = vmul.f32 %v868, %v870
    %v872 = vadd.f32 %v868, %v871
    %vm873 = vweird.f32 %v867
    %vm874 = vweird.f32 %v868
    %vm875 = vmor %vm873, %vm874
    %v876 = vsel %vm875, %v868, %v872
    %v877 = vand.u32 2147483647, %v867
    %vm878 = vcmp.eq.f32.partialorder %v877, 8.507059e+37
    %v879 = vand.u32 %v867, 2147483648
    %v880 = vor.u32 1.1754944e-38, %v879
    %v881 = vsel %vm878, %v880, %v876
    %v882 = vmul.f32 1.0, %v881
    %v883 = vtanh.pop %v863
    %v885 = vrot.slane %v827, 6
    %v887 = vmul.f32 %v882, %v885
    %889 = vrot.lane.b32.xlu0 %v883, 32
    %v890 = vpop.permute.xlu0 %889
    %v892 = vmul.f32 %v882, %v890
    %894 = vrot.lane.b32.xlu0 %v892, 32
    %v895 = vpop.permute.xlu0 %894
    %v897 = vadd.f32 %v887, %v895
    %v898 = vtanh.pop %v897
    %900 = vrot.lane.b32.xlu0 %v898, 32
    %v901 = vpop.permute.xlu0 %900
    %v903 = vmul.f32 %v882, %v901
    %v905 = vrot.slane %v903, 6
    %906 = vrot.lane.b32.xlu0 %v905, 64
    %v907 = vpop.permute.xlu0 %906
    %v908 = vsel %vm601, %v907, 0
    %910 = vmatpush.msra.mxu0 0.0
    %911 = vmatpush.msra.mxu0 0.0
    %912 = vmatpush.msra.mxu0 0.0
    %913 = vmatpush.msra.mxu0 0.0
    %914 = vmatpush.msra.mxu0 0.0
    %915 = vmatpush.msra.mxu0 0.0
    %916 = vmatpush.msra.mxu0 0.0
    %917 = vmatpush.msra.mxu0 0.0
    %918 = vmatpush.msra.mxu0 0.0
    %919 = vmatpush.msra.mxu0 0.0
    %920 = vmatpush.msra.mxu0 0.0
    %921 = vmatpush.msra.mxu0 0.0
    %922 = vmatpush.msra.mxu0 %v633
    %923 = vmatpush.msra.mxu0 %v632
    %924 = vmatpush.msra.mxu0 %v631
    %925 = vmatpush.msra.mxu0 %v630
    %926 = vmatmul.f32.gmra.mxu0 %v908
    %v927 = vpop.f32.mrf.mxu0
    %v928 = vadd.f32 0.0, %v927
    %929 = vdwg.mxu0
    %v930 = vadd.f32 %v628, %v928
    %v931 = vxor.u32 %v930, 2147483648
    %v932 = vmul.f32 %v931, 1.442695
    %v933 = vpow.pop %v932
    %v934 = vadd.f32 %v933, 1.0
    %v935 = vrcp.pop %v934
    %v936 = vmul.f32 %v934, %v935
    %v937 = vsub.f32 1.0, %v936
    %v938 = vmul.f32 %v935, %v937
    %v939 = vadd.f32 %v935, %v938
    %vm940 = vweird.f32 %v934
    %vm941 = vweird.f32 %v935
    %vm942 = vmor %vm940, %vm941
    %v943 = vsel %vm942, %v935, %v939
    %v944 = vand.u32 2147483647, %v934
    %vm945 = vcmp.eq.f32.partialorder %v944, 8.507059e+37
    %v946 = vand.u32 %v934, 2147483648
    %v947 = vor.u32 1.1754944e-38, %v946
    %v948 = vsel %vm945, %v947, %v943
    %v949 = vmul.f32 1.0, %v948
    %v950 = vtanh.pop %v930
    %v952 = vrot.slane %v897, 6
    %v954 = vmul.f32 %v949, %v952
    %956 = vrot.lane.b32.xlu0 %v950, 32
    %v957 = vpop.permute.xlu0 %956
    %v959 = vmul.f32 %v949, %v957
    %961 = vrot.lane.b32.xlu0 %v959, 32
    %v962 = vpop.permute.xlu0 %961
    %v964 = vadd.f32 %v954, %v962
    %v965 = vtanh.pop %v964
    %967 = vrot.lane.b32.xlu0 %v965, 32
    %v968 = vpop.permute.xlu0 %967
    %v970 = vmul.f32 %v949, %v968
    %972 = vrot.lane.b32.xlu0 %v970, 64
    %v973 = vpop.permute.xlu0 %972
    %v974 = vsel %vm601, %v973, 0
    %976 = vmatpush.msra.mxu0 0.0
    %977 = vmatpush.msra.mxu0 0.0
    %978 = vmatpush.msra.mxu0 0.0
    %979 = vmatpush.msra.mxu0 0.0
    %980 = vmatpush.msra.mxu0 0.0
    %981 = vmatpush.msra.mxu0 0.0
    %982 = vmatpush.msra.mxu0 0.0
    %983 = vmatpush.msra.mxu0 0.0
    %984 = vmatpush.msra.mxu0 0.0
    %985 = vmatpush.msra.mxu0 0.0
    %986 = vmatpush.msra.mxu0 0.0
    %987 = vmatpush.msra.mxu0 0.0
    %988 = vmatpush.msra.mxu0 %v633
    %989 = vmatpush.msra.mxu0 %v632
    %990 = vmatpush.msra.mxu0 %v631
    %991 = vmatpush.msra.mxu0 %v630
    %992 = vmatmul.f32.gmra.mxu0 %v974
    %v993 = vpop.f32.mrf.mxu0
    %v994 = vadd.f32 0.0, %v993
    %995 = vdwg.mxu0
    %v997 = vrot.slane %v994, 6
    %v999 = vadd.f32 %v628, %v997
    %v1000 = vxor.u32 %v999, 2147483648
    %v1001 = vmul.f32 %v1000, 1.442695
    %v1002 = vpow.pop %v1001
    %v1003 = vadd.f32 %v1002, 1.0
    %v1004 = vrcp.pop %v1003
    %v1005 = vmul.f32 %v1003, %v1004
    %v1006 = vsub.f32 1.0, %v1005
    %v1007 = vmul.f32 %v1004, %v1006
    %v1008 = vadd.f32 %v1004, %v1007
    %vm1009 = vweird.f32 %v1003
    %vm1010 = vweird.f32 %v1004
    %vm1011 = vmor %vm1009, %vm1010
    %v1012 = vsel %vm1011, %v1004, %v1008
    %v1013 = vand.u32 2147483647, %v1003
    %vm1014 = vcmp.eq.f32.partialorder %v1013, 8.507059e+37
    %v1015 = vand.u32 %v1003, 2147483648
    %v1016 = vor.u32 1.1754944e-38, %v1015
    %v1017 = vsel %vm1014, %v1016, %v1012
    %v1018 = vmul.f32 1.0, %v1017
    %v1019 = vtanh.pop %v999
    %v1021 = vrot.slane %v964, 6
    %v1023 = vmul.f32 %v1018, %v1021
    %1025 = vrot.lane.b32.xlu0 %v1019, 32
    %v1026 = vpop.permute.xlu0 %1025
    %v1028 = vmul.f32 %v1018, %v1026
    %1030 = vrot.lane.b32.xlu0 %v1028, 32
    %v1031 = vpop.permute.xlu0 %1030
    %v1033 = vadd.f32 %v1023, %v1031
    %v1034 = vtanh.pop %v1033
    %1036 = vrot.lane.b32.xlu0 %v1034, 32
    %v1037 = vpop.permute.xlu0 %1036
    %v1039 = vmul.f32 %v1018, %v1037
    %v1041 = vrot.slane %v1039, 2
    %1042 = vrot.lane.b32.xlu0 %v1041, 64
    %v1043 = vpop.permute.xlu0 %1042
    %v1044 = vsel %vm601, %v1043, 0
    %1046 = vmatpush.msra.mxu0 0.0
    %1047 = vmatpush.msra.mxu0 0.0
    %1048 = vmatpush.msra.mxu0 0.0
    %1049 = vmatpush.msra.mxu0 0.0
    %1050 = vmatpush.msra.mxu0 0.0
    %1051 = vmatpush.msra.mxu0 0.0
    %1052 = vmatpush.msra.mxu0 0.0
    %1053 = vmatpush.msra.mxu0 0.0
    %1054 = vmatpush.msra.mxu0 0.0
    %1055 = vmatpush.msra.mxu0 0.0
    %1056 = vmatpush.msra.mxu0 0.0
    %1057 = vmatpush.msra.mxu0 0.0
    %1058 = vmatpush.msra.mxu0 %v633
    %1059 = vmatpush.msra.mxu0 %v632
    %1060 = vmatpush.msra.mxu0 %v631
    %1061 = vmatpush.msra.mxu0 %v630
    %1062 = vmatmul.f32.gmra.mxu0 %v1044
    %v1063 = vpop.f32.mrf.mxu0
    %v1064 = vadd.f32 0.0, %v1063
    %1065 = vdwg.mxu0
    %v1067 = vrot.slane %v1064, 4
    %v1069 = vadd.f32 %v628, %v1067
    %v1070 = vxor.u32 %v1069, 2147483648
    %v1071 = vmul.f32 %v1070, 1.442695
    %v1072 = vpow.pop %v1071
    %v1073 = vadd.f32 %v1072, 1.0
    %v1074 = vrcp.pop %v1073
    %v1075 = vmul.f32 %v1073, %v1074
    %v1076 = vsub.f32 1.0, %v1075
    %v1077 = vmul.f32 %v1074, %v1076
    %v1078 = vadd.f32 %v1074, %v1077
    %vm1079 = vweird.f32 %v1073
    %vm1080 = vweird.f32 %v1074
    %vm1081 = vmor %vm1079, %vm1080
    %v1082 = vsel %vm1081, %v1074, %v1078
    %v1083 = vand.u32 2147483647, %v1073
    %vm1084 = vcmp.eq.f32.partialorder %v1083, 8.507059e+37
    %v1085 = vand.u32 %v1073, 2147483648
    %v1086 = vor.u32 1.1754944e-38, %v1085
    %v1087 = vsel %vm1084, %v1086, %v1082
    %v1088 = vmul.f32 1.0, %v1087
    %v1089 = vtanh.pop %v1069
    %v1091 = vrot.slane %v1033, 6
    %v1093 = vmul.f32 %v1088, %v1091
    %1095 = vrot.lane.b32.xlu0 %v1089, 32
    %v1096 = vpop.permute.xlu0 %1095
    %v1098 = vmul.f32 %v1088, %v1096
    %1100 = vrot.lane.b32.xlu0 %v1098, 32
    %v1101 = vpop.permute.xlu0 %1100
    %v1103 = vadd.f32 %v1093, %v1101
    %v1104 = vtanh.pop %v1103
    %1106 = vrot.lane.b32.xlu0 %v1104, 32
    %v1107 = vpop.permute.xlu0 %1106
    %v1109 = vmul.f32 %v1088, %v1107
    %v1111 = vrot.slane %v1109, 4
    %1112 = vrot.lane.b32.xlu0 %v1111, 64
    %v1113 = vpop.permute.xlu0 %1112
    %v1114 = vsel %vm601, %v1113, 0
    %1116 = vmatpush.msra.mxu0 0.0
    %1117 = vmatpush.msra.mxu0 0.0
    %1118 = vmatpush.msra.mxu0 0.0
    %1119 = vmatpush.msra.mxu0 0.0
    %1120 = vmatpush.msra.mxu0 0.0
    %1121 = vmatpush.msra.mxu0 0.0
    %1122 = vmatpush.msra.mxu0 0.0
    %1123 = vmatpush.msra.mxu0 0.0
    %1124 = vmatpush.msra.mxu0 0.0
    %1125 = vmatpush.msra.mxu0 0.0
    %1126 = vmatpush.msra.mxu0 0.0
    %1127 = vmatpush.msra.mxu0 0.0
    %1128 = vmatpush.msra.mxu0 %v633
    %1129 = vmatpush.msra.mxu0 %v632
    %1130 = vmatpush.msra.mxu0 %v631
    %1131 = vmatpush.msra.mxu0 %v630
    %1132 = vmatmul.f32.gmra.mxu0 %v1114
    %v1133 = vpop.f32.mrf.mxu0
    %v1134 = vadd.f32 0.0, %v1133
    %1135 = vdwg.mxu0
    %v1137 = vrot.slane %v1134, 2
    %v1139 = vadd.f32 %v628, %v1137
    %v1140 = vxor.u32 %v1139, 2147483648
    %v1141 = vmul.f32 %v1140, 1.442695
    %v1142 = vpow.pop %v1141
    %v1143 = vadd.f32 %v1142, 1.0
    %v1144 = vrcp.pop %v1143
    %v1145 = vmul.f32 %v1143, %v1144
    %v1146 = vsub.f32 1.0, %v1145
    %v1147 = vmul.f32 %v1144, %v1146
    %v1148 = vadd.f32 %v1144, %v1147
    %vm1149 = vweird.f32 %v1143
    %vm1150 = vweird.f32 %v1144
    %vm1151 = vmor %vm1149, %vm1150
    %v1152 = vsel %vm1151, %v1144, %v1148
    %v1153 = vand.u32 2147483647, %v1143
    %vm1154 = vcmp.eq.f32.partialorder %v1153, 8.507059e+37
    %v1155 = vand.u32 %v1143, 2147483648
    %v1156 = vor.u32 1.1754944e-38, %v1155
    %v1157 = vsel %vm1154, %v1156, %v1152
    %v1158 = vmul.f32 1.0, %v1157
    %v1159 = vtanh.pop %v1139
    %v1161 = vrot.slane %v1103, 6
    %v1163 = vmul.f32 %v1158, %v1161
    %1165 = vrot.lane.b32.xlu0 %v1159, 32
    %v1166 = vpop.permute.xlu0 %1165
    %v1168 = vmul.f32 %v1158, %v1166
    %1170 = vrot.lane.b32.xlu0 %v1168, 32
    %v1171 = vpop.permute.xlu0 %1170
    %v1173 = vadd.f32 %v1163, %v1171
    %v1174 = vtanh.pop %v1173
    %1176 = vrot.lane.b32.xlu0 %v1174, 32
    %v1177 = vpop.permute.xlu0 %1176
    %v1179 = vmul.f32 %v1158, %v1177
    %v1181 = vrot.slane %v833, 2
    %v1183 = vrot.slane %v903, 2
    %v1185 = vrot.slane %v970, 2
    %v1188 = vrot.slane %v1109, 2
    %v1191 = vrot.slane %v1179, 2
    %v1193 = vsel %vm587, %v765, %v1181
    %vm1194 = vcmask 1043456
    %v1195 = vsel %vm1194, %v1193, %v1183
    %vm1196 = vcmask 1045504
    %v1197 = vsel %vm1196, %v1195, %v1185
    %v1198 = vsel %vm587, %v1041, %v1188
    %v1199 = vsel %vm1194, %v1198, %v1191
    %v1200 = vld [vmem:[%s8] sm:$0xff]
    %v1201 = vld [vmem:[%s8 + $0x8] sm:$0xff]
    %v1202 = vld [vmem:[%s8 + $0x10] sm:$0xff]
    %v1203 = vld [vmem:[%s8 + $0x18] sm:$0xff]
    %v1204 = vld [vmem:[%s9] sm:$0x1]
    %v1206 = vperm.slane %v1204, 0
    %1210 = vrot.lane.b32.xlu0 %v1197, 64
    %v1211 = vpop.permute.xlu0 %1210
    %1212 = vrot.lane.b32.xlu0 %v1199, 64
    %v1213 = vpop.permute.xlu0 %1212
    %v1214 = vsel %vm601, %v1211, 0
    %v1216 = vsel %vm601, %v1213, 0
    %1218 = vmatpush.msra.mxu0 0.0
    %1219 = vmatpush.msra.mxu0 0.0
    %1220 = vmatpush.msra.mxu0 0.0
    %1221 = vmatpush.msra.mxu0 0.0
    %1222 = vmatpush.msra.mxu0 0.0
    %1223 = vmatpush.msra.mxu0 0.0
    %1224 = vmatpush.msra.mxu0 0.0
    %1225 = vmatpush.msra.mxu0 0.0
    %1226 = vmatpush.msra.mxu0 0.0
    %1227 = vmatpush.msra.mxu0 0.0
    %1228 = vmatpush.msra.mxu0 0.0
    %1229 = vmatpush.msra.mxu0 0.0
    %1230 = vmatpush.msra.mxu0 %v1203
    %1231 = vmatpush.msra.mxu0 %v1202
    %1232 = vmatpush.msra.mxu0 %v1201
    %1233 = vmatpush.msra.mxu0 %v1200
    %1234 = vmatmul.f32.gmra.mxu0 %v1214
    %v1235 = vpop.f32.mrf.mxu0
    %v1236 = vadd.f32 %v1206, %v1235
    %1237 = vmatmul.f32.gmra.mxu0 %v1216
    %v1238 = vpop.f32.mrf.mxu0
    %v1239 = vadd.f32 %v1206, %v1238
    %1240 = vdwg.mxu0
    %v1241 = vmax.f32 %v1236, 0.0
    %v1242 = vmax.f32 %v1239, 0.0
    %v1243 = vld [vmem:[#allocation4] sm:$0xff]
    %v1244 = vld [vmem:[#allocation4 + $0x8] sm:$0xff]
    %v1245 = vld [vmem:[#allocation4 + $0x10] sm:$0xff]
    %v1246 = vld [vmem:[#allocation4 + $0x18] sm:$0xff]
    %v1247 = vld [vmem:[#allocation4 + $0x20] sm:$0xff]
    %v1248 = vld [vmem:[#allocation4 + $0x28] sm:$0xff]
    %v1249 = vld [vmem:[#allocation4 + $0x30] sm:$0xff]
    %v1250 = vld [vmem:[#allocation4 + $0x38] sm:$0xff]
    %v1251 = vld [vmem:[#allocation4 + $0x40] sm:$0xff]
    %v1252 = vld [vmem:[#allocation4 + $0x48] sm:$0xff]
    %v1253 = vld [vmem:[#allocation4 + $0x50] sm:$0xff]
    %v1254 = vld [vmem:[#allocation4 + $0x58] sm:$0xff]
    %v1255 = vld [vmem:[#allocation4 + $0x60] sm:$0xff]
    %v1256 = vld [vmem:[#allocation4 + $0x68] sm:$0xff]
    %v1257 = vld [vmem:[#allocation4 + $0x70] sm:$0xff]
    %v1258 = vld [vmem:[#allocation4 + $0x78] sm:$0xff]
    %v1259 = vld [vmem:[%s11] sm:$0x1]
    %v1261 = vperm.slane %v1259, 0
    %1263 = vmatpush.msra.mxu0 %v1258
    %1264 = vmatpush.msra.mxu0 %v1257
    %1265 = vmatpush.msra.mxu0 %v1256
    %1266 = vmatpush.msra.mxu0 %v1255
    %1267 = vmatpush.msra.mxu0 %v1254
    %1268 = vmatpush.msra.mxu0 %v1253
    %1269 = vmatpush.msra.mxu0 %v1252
    %1270 = vmatpush.msra.mxu0 %v1251
    %1271 = vmatpush.msra.mxu0 %v1250
    %1272 = vmatpush.msra.mxu0 %v1249
    %1273 = vmatpush.msra.mxu0 %v1248
    %1274 = vmatpush.msra.mxu0 %v1247
    %1275 = vmatpush.msra.mxu0 %v1246
    %1276 = vmatpush.msra.mxu0 %v1245
    %1277 = vmatpush.msra.mxu0 %v1244
    %1278 = vmatpush.msra.mxu0 %v1243
    %1279 = vmatmul.f32.gmra.mxu0 %v1241
    %v1280 = vpop.f32.mrf.mxu0
    %v1281 = vadd.f32 %v1261, %v1280
    %1282 = vmatmul.f32.gmra.mxu0 %v1242
    %v1283 = vpop.f32.mrf.mxu0
    %v1284 = vadd.f32 %v1261, %v1283
    %1285 = vdwg.mxu0
    %1286 = vst [vmem:[%s12] sm:$0xff] %v1281
    %1287 = vst [vmem:[%s12 + $0x8] sm:$0x3f] %v1284
    // Predicated region
    $region54: #{lstm_model_forward.1} parent=1 // pred_check
      _
    $region55: #{lstm_model_forward.1} parent=1 // pred_check_branch
      %1289 = sbr.rel (0) target = $region57
    $region56: #{lstm_model_forward.1} parent=1 // pred_region
      _
    $region57: #{lstm_model_forward.1} parent=1 // pred_fallthru
      _
    // Predicated region
    $region58: #{lstm_model_forward.1} parent=1 // pred_check
      _
    $region59: #{lstm_model_forward.1} parent=1 // pred_check_branch
      %1291 = sbr.rel (0) target = $region61
    $region60: #{lstm_model_forward.1} parent=1 // pred_region
      _
    $region61: #{lstm_model_forward.1} parent=1 // pred_fallthru
      _
    %1292 = vsyncpa [#allocation5], 1
  %1293 = vsyncmov [#allocation3]
  %s1294 = vpop.sfrf %1293
  %p1295 = scmp.eq.s32.totalorder %s1294, 0
  %p1296 = pneg %p1295
  %1298 = shalt.err (%p1296)

</llo_original>
